<compile_context>
chip_gen: v7x
topology: tpu7x:2x2x1
jax: 0.10.0
libtpu: 0.0.40
codegen_flags: <defaults>
</compile_context>

<pallas_src>
import jax
import jax.numpy as jnp
from jax.experimental import pallas as pl
from jax.experimental.pallas import tpu as pltpu

EPS = 1e-5          # PyTorch BatchNorm1d default
LANE = 128          # lane width


# --------------------------------------------------------------------------- #
# Kernel                                                                       #
# --------------------------------------------------------------------------- #
def _mlp_kernel(x_ref,
                w1, b1, w2, b2, w3, b3, w4, b4, w5, b5,
                o_ref):
    """Fused 5-layer MLP (BN pre-folded). bf16 matmul operands, f32 accumulation."""

    def lin(h, w_ref, b_ref):
        return (jnp.dot(h.astype(jnp.bfloat16), w_ref[...],
                        preferred_element_type=jnp.float32)
                + b_ref[...])

    h = x_ref[...]                              # already bf16 (cast in wrapper)
    h = jnp.maximum(lin(h, w1, b1), 0.0)
    h = jnp.maximum(lin(h, w2, b2), 0.0)
    h = jnp.maximum(lin(h, w3, b3), 0.0)
    h = jnp.maximum(lin(h, w4, b4), 0.0)
    # Dropout layers are identity in eval mode.
    o_ref[...] = lin(h, w5, b5).astype(o_ref.dtype)


# --------------------------------------------------------------------------- #
# Generation-aware knobs                                                       #
# --------------------------------------------------------------------------- #
def _round_up(n, m):
    return ((n + m - 1) // m) * m


def _tpu_info():
    try:
        return pltpu.get_tpu_info()
    except Exception:
        return None


def _pick_tile_b(batch):
    """128 for v5-class chips (4x128 MXU), 256 for v6e/v7x (2x256 MXU)."""
    tile = 256
    info = _tpu_info()
    if info is None:
        tile = 128
    else:
        ver = str(getattr(info, "chip_version", ""))
        if any(d in ver for d in ("2", "3", "4", "5")):
            tile = 128
    # keep >= 2 grid steps when the batch allows, so both v7x cores get work
    while tile > 128 and pl.cdiv(batch, tile) < 2:
        tile //= 2
    return tile


def _vmem_limit_bytes(kernel_params, tile_b, in_pad, out_pad):
    """Actual footprint + headroom, never the full physical VMEM."""
    param_bytes = sum(int(p.size) * p.dtype.itemsize for p in kernel_params)
    x_tile = 2 * tile_b * in_pad * 2           # double-buffered bf16 activations
    o_tile = 2 * tile_b * out_pad * 4          # double-buffered f32 output tile
    widest = max(int(p.shape[-1]) for p in kernel_params)
    interm = 4 * tile_b * widest * 4           # a few live f32 intermediates
    need = param_bytes + x_tile + o_tile + interm
    info = _tpu_info()
    cap = int(getattr(info, "vmem_capacity_bytes", 64 << 20)) if info else (64 << 20)
    return max(32 << 20, min(need + (16 << 20), int(cap * 0.85)))


# --------------------------------------------------------------------------- #
# Wrapper                                                                      #
# --------------------------------------------------------------------------- #
def mynetwork_forward(x, kernel_params, *, tile_b=None):
    """x: (B, input_size) f32.  kernel_params: [W1',b1',...,W5',b5'] (BN folded,
    all dims lane-padded).  Returns (B, out_padded) f32; caller slices the
    padded output columns."""
    B, in_size = x.shape
    in_pad = kernel_params[0].shape[0]
    out_pad = kernel_params[-1].shape[-1]

    if tile_b is None:
        tile_b = _pick_tile_b(B)

    # Pad batch to a multiple of tile_b and features to the lane-padded width;
    # stream activations as bf16 (halves the per-step DMA).
    n_tiles = pl.cdiv(B, tile_b)
    b_pad = n_tiles * tile_b
    x = jnp.pad(x, ((0, b_pad - B), (0, in_pad - in_size))).astype(jnp.bfloat16)

    _resident = lambda i: (0, 0)     # params stay put across grid steps
    in_specs = [pl.BlockSpec((tile_b, in_pad), lambda i: (i, 0))]
    # Constant index map -> single-buffer the resident params (no wasted VMEM).
    in_specs += [pl.BlockSpec(p.shape, _resident, pipeline_mode=pl.Buffered(1))
                 for p in kernel_params]
    out_specs = pl.BlockSpec((tile_b, out_pad), lambda i: (i, 0))

    # Advisory cost estimate (matmul flops + bytes moved).
    flops = 0
    for li in range(5):
        w = kernel_params[2 * li]
        flops += 2 * b_pad * w.shape[0] * w.shape[1]
    bytes_accessed = (x.size * x.dtype.itemsize
                      + b_pad * out_pad * 4
                      + sum(int(p.size) * p.dtype.itemsize for p in kernel_params))

    out = pl.pallas_call(
        _mlp_kernel,
        out_shape=jax.ShapeDtypeStruct((b_pad, out_pad), jnp.float32),
        grid=(n_tiles,),
        in_specs=in_specs,
        out_specs=out_specs,
        compiler_params=pltpu.CompilerParams(
            dimension_semantics=("parallel",),
            vmem_limit_bytes=_vmem_limit_bytes(kernel_params, tile_b,
                                               in_pad, out_pad),
        ),
        cost_estimate=pl.CostEstimate(
            flops=flops, transcendentals=0, bytes_accessed=bytes_accessed),
    )(x, *kernel_params)
    return out[:B]


# --------------------------------------------------------------------------- #
# Parameter construction / BN folding                                          #
# --------------------------------------------------------------------------- #
def init_params(key, context_size, feature_size, hidden_size, output_size):
    """Deterministic synthetic parameters with the same shapes as MyNetwork.__init__.
    Weights are stored (in_features, out_features); BN vectors as (1, d) rows."""
    input_size = (2 * context_size + 1) * feature_size
    dims = [input_size, hidden_size, hidden_size // 2, hidden_size // 4,
            hidden_size // 8, output_size]

    params = []
    keys = jax.random.split(key, 16)
    ki = 0
    for li in range(5):
        d_in, d_out = dims[li], dims[li + 1]
        scale = 1.0 / jnp.sqrt(jnp.float32(d_in))
        w = jax.random.uniform(keys[ki], (d_in, d_out), jnp.float32, -scale, scale)
        ki += 1
        b = jax.random.uniform(keys[ki], (1, d_out), jnp.float32, -scale, scale)
        ki += 1
        params += [w, b]
        if li < 4:  # layers 1-4 have BatchNorm; layer 5 does not
            gamma = jnp.ones((1, d_out), jnp.float32)
            beta = jnp.zeros((1, d_out), jnp.float32)
            mean = 0.01 * jnp.arange(d_out, dtype=jnp.float32).reshape(1, d_out)
            var = jnp.ones((1, d_out), jnp.float32) + 0.001 * jnp.arange(
                d_out, dtype=jnp.float32).reshape(1, d_out)
            params += [gamma, beta, mean, var]
    return params, input_size


def fold_and_pack_params(raw_params):
    """Fold eval-mode BatchNorm into the following Linear (in f32), zero-pad
    every feature dim to a multiple of 128 (lane-dense DMA / full MXU passes),
    then cast W to bf16.

    raw_params: [W1,b1,g1,be1,m1,v1, ..., W4,b4,g4,be4,m4,v4, W5,b5]  (all f32).
    Returns [W1',b1', ..., W5',b5'] with W bf16, b f32 (1, d_out_padded)."""
    idx = 0
    folded = []
    scale = None   # (d_prev,)  BN scale of previous layer, folded into this W
    shift = None   # (1,d_prev) BN shift of previous layer, folded into this b
    for li in range(5):
        w, b = raw_params[idx], raw_params[idx + 1]
        idx += 2
        if scale is not None:
            b = b + shift @ w
            w = scale[:, None] * w
        if li < 4:
            g, be, m, v = raw_params[idx:idx + 4]
            idx += 4
            s = g * jax.lax.rsqrt(v + EPS)      # (1, d_out)
            shift = be - m * s
            scale = s.reshape(-1)
        folded.append((w, b))

    packed = []
    for w, b in folded:
        d_in, d_out = w.shape
        in_pad, out_pad = _round_up(d_in, LANE), _round_up(d_out, LANE)
        if (in_pad, out_pad) != (d_in, d_out):
            w = jnp.pad(w, ((0, in_pad - d_in), (0, out_pad - d_out)))
            b = jnp.pad(b, ((0, 0), (0, out_pad - d_out)))
        packed += [w.astype(jnp.bfloat16), b.astype(jnp.float32)]
    return packed


# --------------------------------------------------------------------------- #
# Pure-JAX references                                                          #
# --------------------------------------------------------------------------- #
def reference_folded(x, kernel_params):
    """Same folded/padded bf16 parameters / same math as the kernel (tight check)."""
    in_pad = kernel_params[0].shape[0]
    h = jnp.pad(x, ((0, 0), (0, in_pad - x.shape[1]))).astype(jnp.bfloat16)
    for li in range(5):
        w, b = kernel_params[2 * li], kernel_params[2 * li + 1]
        h = jnp.dot(h.astype(jnp.bfloat16), w,
                    preferred_element_type=jnp.float32) + b
        if li < 4:
            h = jnp.maximum(h, 0.0)
    return h


def reference_unfolded(x, raw_params):
    """Original eval-mode semantics in f32 (loose check of the BN fold)."""
    idx = 0
    h = x
    for li in range(4):
        w, b, g, be, m, v = raw_params[idx:idx + 6]
        idx += 6
        h = jnp.maximum(h @ w + b, 0.0)
        h = (h - m) * jax.lax.rsqrt(v + EPS) * g + be
    w, b = raw_params[idx:idx + 2]
    return h @ w + b


# --------------------------------------------------------------------------- #
# Driver                                                                       #
# --------------------------------------------------------------------------- #
if __name__ == "__main__":
    context_size = 3
    feature_size = 8
    hidden_size = 256      # module script uses 4096; scaled down for the example
    output_size = 138
    batch = 200            # padded to a multiple of the chosen batch tile

    key = jax.random.PRNGKey(0)
    pkey, xkey = jax.random.split(key)
    raw_params, input_size = init_params(pkey, context_size, feature_size,
                                         hidden_size, output_size)
    kernel_params = fold_and_pack_params(raw_params)
    x = jax.random.normal(xkey, (batch, input_size), jnp.float32)

    out_padded = mynetwork_forward(x, kernel_params)
    out = out_padded[:, :output_size]
    out = jax.block_until_ready(out)
    assert out.shape == (batch, output_size)

    # Tight check: same folded bf16 params via plain XLA ops.
    ref_f = reference_folded(x, kernel_params)[:, :output_size]
    assert jnp.allclose(out, ref_f, atol=1e-3, rtol=1e-3), \
        "mismatch vs folded bf16 reference"

    # Loose check: original unfolded f32 eval-mode semantics (bf16 weight error only).
    ref = reference_unfolded(x, raw_params)
    assert jnp.allclose(out, ref, atol=5e-2, rtol=5e-2), \
        "mismatch vs f32 eval-mode reference"

    print("KERNEL_OK")
</pallas_src>

<mosaic_0001>
module attributes {stable_mosaic.version = 11 : i64} {
  func.func @_mlp_kernel(%arg0: i32, %arg1: memref<128x128xbf16, #tpu.memory_space<vmem>>, %arg2: memref<128x256xbf16, #tpu.memory_space<vmem>>, %arg3: memref<1x256xf32, #tpu.memory_space<vmem>>, %arg4: memref<256x128xbf16, #tpu.memory_space<vmem>>, %arg5: memref<1x128xf32, #tpu.memory_space<vmem>>, %arg6: memref<128x128xbf16, #tpu.memory_space<vmem>>, %arg7: memref<1x128xf32, #tpu.memory_space<vmem>>, %arg8: memref<128x128xbf16, #tpu.memory_space<vmem>>, %arg9: memref<1x128xf32, #tpu.memory_space<vmem>>, %arg10: memref<128x256xbf16, #tpu.memory_space<vmem>>, %arg11: memref<1x256xf32, #tpu.memory_space<vmem>>, %arg12: memref<128x256xf32, #tpu.memory_space<vmem>>) attributes {dimension_semantics = [#tpu.dimension_semantics<parallel>], iteration_bounds = array<i64: 2>, scalar_prefetch = 0 : i64, scratch_operands = 0 : i64, tpu.core_type = #tpu.core_type<tc>, window_params = [{transform_indices = @transform_0, window_bounds = array<i64: 128, 128>}, {pipeline_mode = #tpu.pipeline_mode<synchronous>, transform_indices = @transform_1, window_bounds = array<i64: 128, 256>}, {pipeline_mode = #tpu.pipeline_mode<synchronous>, transform_indices = @transform_2, window_bounds = array<i64: 1, 256>}, {pipeline_mode = #tpu.pipeline_mode<synchronous>, transform_indices = @transform_3, window_bounds = array<i64: 256, 128>}, {pipeline_mode = #tpu.pipeline_mode<synchronous>, transform_indices = @transform_4, window_bounds = array<i64: 1, 128>}, {pipeline_mode = #tpu.pipeline_mode<synchronous>, transform_indices = @transform_5, window_bounds = array<i64: 128, 128>}, {pipeline_mode = #tpu.pipeline_mode<synchronous>, transform_indices = @transform_6, window_bounds = array<i64: 1, 128>}, {pipeline_mode = #tpu.pipeline_mode<synchronous>, transform_indices = @transform_7, window_bounds = array<i64: 128, 128>}, {pipeline_mode = #tpu.pipeline_mode<synchronous>, transform_indices = @transform_8, window_bounds = array<i64: 1, 128>}, {pipeline_mode = #tpu.pipeline_mode<synchronous>, transform_indices = @transform_9, window_bounds = array<i64: 128, 256>}, {pipeline_mode = #tpu.pipeline_mode<synchronous>, transform_indices = @transform_10, window_bounds = array<i64: 1, 256>}, {transform_indices = @transform_11, window_bounds = array<i64: 128, 256>}]} {
    %c0 = arith.constant 0 : index
    %c0_0 = arith.constant 0 : index
    %0 = vector.load %arg1[%c0, %c0_0] : memref<128x128xbf16, #tpu.memory_space<vmem>>, vector<128x128xbf16>
    %c0_1 = arith.constant 0 : index
    %c0_2 = arith.constant 0 : index
    %1 = vector.load %arg2[%c0_1, %c0_2] : memref<128x256xbf16, #tpu.memory_space<vmem>>, vector<128x256xbf16>
    %cst = arith.constant dense<0.000000e+00> : vector<128x256xf32>
    %2 = tpu.matmul %0, %1, %cst {dimension_numbers = #tpu.dot_dimension_numbers<[1], [0], [0], [1], [0, 0, 1, 1], [], []>} : vector<128x128xbf16>, vector<128x256xbf16>, vector<128x256xf32> -> vector<128x256xf32>
    %c0_3 = arith.constant 0 : index
    %c0_4 = arith.constant 0 : index
    %3 = vector.load %arg3[%c0_3, %c0_4] : memref<1x256xf32, #tpu.memory_space<vmem>>, vector<1x256xf32>
    %4 = vector.broadcast %3 : vector<1x256xf32> to vector<128x256xf32>
    %5 = arith.addf %2, %4 : vector<128x256xf32>
    %cst_5 = arith.constant 0.000000e+00 : f32
    %6 = vector.broadcast %cst_5 : f32 to vector<128x256xf32>
    %7 = arith.maximumf %5, %6 : vector<128x256xf32>
    %8 = arith.truncf %7 : vector<128x256xf32> to vector<128x256xbf16>
    %c0_6 = arith.constant 0 : index
    %c0_7 = arith.constant 0 : index
    %9 = vector.load %arg4[%c0_6, %c0_7] : memref<256x128xbf16, #tpu.memory_space<vmem>>, vector<256x128xbf16>
    %cst_8 = arith.constant dense<0.000000e+00> : vector<128x128xf32>
    %10 = tpu.matmul %8, %9, %cst_8 {dimension_numbers = #tpu.dot_dimension_numbers<[1], [0], [0], [1], [0, 0, 1, 1], [], []>} : vector<128x256xbf16>, vector<256x128xbf16>, vector<128x128xf32> -> vector<128x128xf32>
    %c0_9 = arith.constant 0 : index
    %c0_10 = arith.constant 0 : index
    %11 = vector.load %arg5[%c0_9, %c0_10] : memref<1x128xf32, #tpu.memory_space<vmem>>, vector<1x128xf32>
    %12 = vector.broadcast %11 : vector<1x128xf32> to vector<128x128xf32>
    %13 = arith.addf %10, %12 : vector<128x128xf32>
    %cst_11 = arith.constant 0.000000e+00 : f32
    %14 = vector.broadcast %cst_11 : f32 to vector<128x128xf32>
    %15 = arith.maximumf %13, %14 : vector<128x128xf32>
    %16 = arith.truncf %15 : vector<128x128xf32> to vector<128x128xbf16>
    %c0_12 = arith.constant 0 : index
    %c0_13 = arith.constant 0 : index
    %17 = vector.load %arg6[%c0_12, %c0_13] : memref<128x128xbf16, #tpu.memory_space<vmem>>, vector<128x128xbf16>
    %cst_14 = arith.constant dense<0.000000e+00> : vector<128x128xf32>
    %18 = tpu.matmul %16, %17, %cst_14 {dimension_numbers = #tpu.dot_dimension_numbers<[1], [0], [0], [1], [0, 0, 1, 1], [], []>} : vector<128x128xbf16>, vector<128x128xbf16>, vector<128x128xf32> -> vector<128x128xf32>
    %c0_15 = arith.constant 0 : index
    %c0_16 = arith.constant 0 : index
    %19 = vector.load %arg7[%c0_15, %c0_16] : memref<1x128xf32, #tpu.memory_space<vmem>>, vector<1x128xf32>
    %20 = vector.broadcast %19 : vector<1x128xf32> to vector<128x128xf32>
    %21 = arith.addf %18, %20 : vector<128x128xf32>
    %cst_17 = arith.constant 0.000000e+00 : f32
    %22 = vector.broadcast %cst_17 : f32 to vector<128x128xf32>
    %23 = arith.maximumf %21, %22 : vector<128x128xf32>
    %24 = arith.truncf %23 : vector<128x128xf32> to vector<128x128xbf16>
    %c0_18 = arith.constant 0 : index
    %c0_19 = arith.constant 0 : index
    %25 = vector.load %arg8[%c0_18, %c0_19] : memref<128x128xbf16, #tpu.memory_space<vmem>>, vector<128x128xbf16>
    %cst_20 = arith.constant dense<0.000000e+00> : vector<128x128xf32>
    %26 = tpu.matmul %24, %25, %cst_20 {dimension_numbers = #tpu.dot_dimension_numbers<[1], [0], [0], [1], [0, 0, 1, 1], [], []>} : vector<128x128xbf16>, vector<128x128xbf16>, vector<128x128xf32> -> vector<128x128xf32>
    %c0_21 = arith.constant 0 : index
    %c0_22 = arith.constant 0 : index
    %27 = vector.load %arg9[%c0_21, %c0_22] : memref<1x128xf32, #tpu.memory_space<vmem>>, vector<1x128xf32>
    %28 = vector.broadcast %27 : vector<1x128xf32> to vector<128x128xf32>
    %29 = arith.addf %26, %28 : vector<128x128xf32>
    %cst_23 = arith.constant 0.000000e+00 : f32
    %30 = vector.broadcast %cst_23 : f32 to vector<128x128xf32>
    %31 = arith.maximumf %29, %30 : vector<128x128xf32>
    %32 = arith.truncf %31 : vector<128x128xf32> to vector<128x128xbf16>
    %c0_24 = arith.constant 0 : index
    %c0_25 = arith.constant 0 : index
    %33 = vector.load %arg10[%c0_24, %c0_25] : memref<128x256xbf16, #tpu.memory_space<vmem>>, vector<128x256xbf16>
    %cst_26 = arith.constant dense<0.000000e+00> : vector<128x256xf32>
    %34 = tpu.matmul %32, %33, %cst_26 {dimension_numbers = #tpu.dot_dimension_numbers<[1], [0], [0], [1], [0, 0, 1, 1], [], []>} : vector<128x128xbf16>, vector<128x256xbf16>, vector<128x256xf32> -> vector<128x256xf32>
    %c0_27 = arith.constant 0 : index
    %c0_28 = arith.constant 0 : index
    %35 = vector.load %arg11[%c0_27, %c0_28] : memref<1x256xf32, #tpu.memory_space<vmem>>, vector<1x256xf32>
    %36 = vector.broadcast %35 : vector<1x256xf32> to vector<128x256xf32>
    %37 = arith.addf %34, %36 : vector<128x256xf32>
    %c0_29 = arith.constant 0 : index
    %c0_30 = arith.constant 0 : index
    %38 = vector.load %arg12[%c0_29, %c0_30] : memref<128x256xf32, #tpu.memory_space<vmem>>, vector<128x256xf32>
    tpu.vector_store %arg12[%c0_29, %c0_30], %37 {strides = array<i32>} : memref<128x256xf32, #tpu.memory_space<vmem>>, vector<128x256xf32>,
    return
  }
  func.func @transform_0(%arg0: i32) -> (i32, i32) {
    %c0_i32 = arith.constant 0 : i32
    %c0_i32_0 = arith.constant 0 : i32
    return %arg0, %c0_i32 : i32, i32
  }
  func.func @transform_1(%arg0: i32) -> (i32, i32) {
    %c0_i32 = arith.constant 0 : i32
    %c0_i32_0 = arith.constant 0 : i32
    %c0_i32_1 = arith.constant 0 : i32
    return %c0_i32, %c0_i32_0 : i32, i32
  }
  func.func @transform_2(%arg0: i32) -> (i32, i32) {
    %c0_i32 = arith.constant 0 : i32
    %c0_i32_0 = arith.constant 0 : i32
    %c0_i32_1 = arith.constant 0 : i32
    return %c0_i32, %c0_i32_0 : i32, i32
  }
  func.func @transform_3(%arg0: i32) -> (i32, i32) {
    %c0_i32 = arith.constant 0 : i32
    %c0_i32_0 = arith.constant 0 : i32
    %c0_i32_1 = arith.constant 0 : i32
    return %c0_i32, %c0_i32_0 : i32, i32
  }
  func.func @transform_4(%arg0: i32) -> (i32, i32) {
    %c0_i32 = arith.constant 0 : i32
    %c0_i32_0 = arith.constant 0 : i32
    %c0_i32_1 = arith.constant 0 : i32
    return %c0_i32, %c0_i32_0 : i32, i32
  }
  func.func @transform_5(%arg0: i32) -> (i32, i32) {
    %c0_i32 = arith.constant 0 : i32
    %c0_i32_0 = arith.constant 0 : i32
    %c0_i32_1 = arith.constant 0 : i32
    return %c0_i32, %c0_i32_0 : i32, i32
  }
  func.func @transform_6(%arg0: i32) -> (i32, i32) {
    %c0_i32 = arith.constant 0 : i32
    %c0_i32_0 = arith.constant 0 : i32
    %c0_i32_1 = arith.constant 0 : i32
    return %c0_i32, %c0_i32_0 : i32, i32
  }
  func.func @transform_7(%arg0: i32) -> (i32, i32) {
    %c0_i32 = arith.constant 0 : i32
    %c0_i32_0 = arith.constant 0 : i32
    %c0_i32_1 = arith.constant 0 : i32
    return %c0_i32, %c0_i32_0 : i32, i32
  }
  func.func @transform_8(%arg0: i32) -> (i32, i32) {
    %c0_i32 = arith.constant 0 : i32
    %c0_i32_0 = arith.constant 0 : i32
    %c0_i32_1 = arith.constant 0 : i32
    return %c0_i32, %c0_i32_0 : i32, i32
  }
  func.func @transform_9(%arg0: i32) -> (i32, i32) {
    %c0_i32 = arith.constant 0 : i32
    %c0_i32_0 = arith.constant 0 : i32
    %c0_i32_1 = arith.constant 0 : i32
    return %c0_i32, %c0_i32_0 : i32, i32
  }
  func.func @transform_10(%arg0: i32) -> (i32, i32) {
    %c0_i32 = arith.constant 0 : i32
    %c0_i32_0 = arith.constant 0 : i32
    %c0_i32_1 = arith.constant 0 : i32
    return %c0_i32, %c0_i32_0 : i32, i32
  }
  func.func @transform_11(%arg0: i32) -> (i32, i32) {
    %c0_i32 = arith.constant 0 : i32
    %c0_i32_0 = arith.constant 0 : i32
    return %arg0, %c0_i32 : i32, i32
  }
}

</mosaic_0001>

<llo_original>
// kernel: tpu_custom_call.1
$region0: #{tpu_custom_call.1}
  #allocation0 [shape = 'u32[]', space=smem, size = 0x4, offset = 0x4, fixed_abs, tag = 'smem constant byte address 0x4 - core index']
  #allocation1 [shape = 'u32[144,128]{1,0:T(1,128)}', space=vmem, size = 0x12000, scoped, tag = 'internal scratch']
  %s0 = inlined_call_operand.hbm [shape: bf16[256,128], index: 0, kind: input, shape index: {}]
  %s1 = inlined_call_operand.hbm [shape: bf16[128,256], index: 1, kind: input, shape index: {}]
  %s2 = inlined_call_operand.vmem [shape: f32[1,256], index: 2, kind: input, shape index: {}]
  %s3 = inlined_call_operand.hbm [shape: bf16[256,128], index: 3, kind: input, shape index: {}]
  %s4 = inlined_call_operand.vmem [shape: f32[1,128], index: 4, kind: input, shape index: {}]
  %s5 = inlined_call_operand.hbm [shape: bf16[128,128], index: 5, kind: input, shape index: {}]
  %s6 = inlined_call_operand.vmem [shape: f32[1,128], index: 6, kind: input, shape index: {}]
  %s7 = inlined_call_operand.hbm [shape: bf16[128,128], index: 7, kind: input, shape index: {}]
  %s8 = inlined_call_operand.vmem [shape: f32[1,128], index: 8, kind: input, shape index: {}]
  %s9 = inlined_call_operand.hbm [shape: bf16[128,256], index: 9, kind: input, shape index: {}]
  %s10 = inlined_call_operand.vmem [shape: f32[1,256], index: 10, kind: input, shape index: {}]
  %s11 = inlined_call_operand.hbm [shape: f32[256,256], index: 11, kind: output, shape index: {}]
  %s12 = sld [smem:[#allocation0]]
  $region101: #{tpu_custom_call.1} parent=0
    _
  %s14 = ssub.s32 1, %s12
  %s15 = scalar_select 0, %s14, %s12
  $region1: #{tpu_custom_call.1} parent=0
    #allocation2 [shape = 'u8[65536]{0}', space=vmem, size = 0x10000, scoped, tag = 'input window, operand 0']
    #allocation3 [shape = 's32[2]{0}', space=sflag, size = 0x8, scoped, tag = 'scoped memory for tpu_custom_call.1']
    #allocation4 [shape = 's32[2]{0}', space=sflag, size = 0x8, scoped, tag = 'scoped memory for tpu_custom_call.1']
    #allocation5 [shape = 'u8[65536]{0}', space=vmem, size = 0x10000, scoped, tag = 'input window, operand 1, single buffered']
    #allocation6 [shape = 's32[1]{0}', space=sflag, size = 0x4, scoped, tag = 'scoped memory for tpu_custom_call.1']
    #allocation7 [shape = 'u8[65536]{0}', space=vmem, size = 0x10000, scoped, tag = 'input window, operand 3, single buffered']
    #allocation8 [shape = 'u8[32768]{0}', space=vmem, size = 0x8000, scoped, tag = 'input window, operand 5, single buffered']
    #allocation9 [shape = 's32[1]{0}', space=sflag, size = 0x4, scoped, tag = 'scoped memory for tpu_custom_call.1']
    #allocation10 [shape = 'u8[32768]{0}', space=vmem, size = 0x8000, scoped, tag = 'input window, operand 7, single buffered']
    #allocation11 [shape = 'u8[65536]{0}', space=vmem, size = 0x10000, scoped, tag = 'input window, operand 9, single buffered']
    #allocation12 [shape = 's32[1]{0}', space=sflag, size = 0x4, scoped, tag = 'scoped memory for tpu_custom_call.1']
    #allocation13 [shape = 'u8[262144]{0}', space=vmem, size = 0x40000, scoped, tag = 'output window, operand 0']
    %16 = vsyncpa [#allocation3], 0
    %s17 = scalar_lea.sflag [#allocation3], 1
    %18 = vsyncpa %s17, 0
    %19 = vsyncpa [#allocation6], 0
    %20 = vsyncpa [#allocation9], 0
    %21 = vsyncpa [#allocation12], 0
    %22 = vsyncpa [#allocation4], 0
    %s23 = scalar_lea.sflag [#allocation4], 1
    %24 = vsyncpa %s23, 0
    loop: start=0, step=1, limit=4
    $region2: #{tpu_custom_call.1} parent=1 // loop_pre_header
      _
    $region3: #{tpu_custom_call.1} parent=1 // loop_header
      %s26 = sphi 0, %s30
      %p27 = scmp.ge.s32.totalorder %s26, 4
      %s36 = sphi 0, %s38
      %s39 = sphi 0, %s36
      %s40 = sphi 0, %s39
      %s56 = sphi 0, %s40
      %s60 = sphi 0, %s60
      %s62 = sphi 0, %s60
      %s63 = sphi 0, %s62
      %s77 = sphi 0, %s63
      %s81 = sphi 0, %s81
      %s83 = sphi 0, %s81
      %s84 = sphi 0, %s83
      %s98 = sphi 0, %s84
      %s102 = sphi 0, %s102
      %s104 = sphi 0, %s102
      %s105 = sphi 0, %s104
      %s119 = sphi 0, %s105
      %s123 = sphi 0, %s123
      %s125 = sphi 0, %s123
      %s126 = sphi 0, %s125
      %s140 = sphi 0, %s126
      %s144 = sphi 0, %s144
      %s146 = sphi 0, %s144
      %s147 = sphi 0, %s146
      %s161 = sphi 0, %s147
      %s165 = sphi 0, %s165
      %s167 = sphi 0, %s165
      %s168 = sphi 0, %s167
      %s182 = sphi 0, %s168
      %s186 = sphi 0, %s186
      %s188 = sphi 0, %s186
      %s189 = sphi 0, %s188
      %s203 = sphi 0, %s189
      %s207 = sphi 0, %s207
      %s209 = sphi 0, %s207
      %s210 = sphi 0, %s209
      %s224 = sphi 0, %s210
      %s228 = sphi 0, %s228
      %s230 = sphi 0, %s228
      %s231 = sphi 0, %s230
      %s245 = sphi 0, %s231
      %s249 = sphi 0, %s249
      %s251 = sphi 0, %s249
      %s252 = sphi 0, %s251
      %s266 = sphi 0, %s252
      %s272 = sphi 0, %s274
      %s275 = sphi 0, %s272
      %s276 = sphi 0, %s275
      %s292 = sphi 0, %s276
    $region4: #{tpu_custom_call.1} parent=1 // loop_header_branch
      %29 = sbr.rel (%p27) target = $region8
    $region5: #{tpu_custom_call.1} parent=1 // loop_body
      %s31 = ssub.s32 %s26, 1
      %s32 = ssub.s32 %s26, 2
      %s33 = sadd.s32 %s26, 1
      %s34 = ssub.s32 %s26, %s33
      %p35 = scmp.eq.s32.totalorder %s34, 0
      %s37 = sadd.s32 %s36, 1
      %s38 = scalar_select %p35, %s36, %s37
      %p41 = pneg %p35
      %p42 = scmp.eq.s32.totalorder %s26, 1
      %p43 = por %p41, %p42
      %p44 = scmp.ne.s32.totalorder %s36, %s39
      %p45 = scmp.eq.s32.totalorder %s26, 0
      %p46 = por %p44, %p45
      %p47 = scmp.ne.s32.totalorder %s36, %s39
      %p48 = scmp.eq.s32.totalorder %s31, 1
      %p49 = por %p47, %p48
      %p50 = scmp.ne.s32.totalorder %s39, %s40
      %p51 = scmp.eq.s32.totalorder %s31, 0
      %p52 = por %p50, %p51
      %p53 = scmp.ne.s32.totalorder %s39, %s40
      %p54 = scmp.eq.s32.totalorder %s32, 1
      %p55 = por %p53, %p54
      %p57 = scmp.ne.s32.totalorder %s40, %s56
      %p58 = scmp.eq.s32.totalorder %s32, 0
      %p59 = por %p57, %p58
      %s61 = sadd.s32 %s60, 1
      %p64 = scmp.eq.s32.totalorder %s26, 1
      %p65 = scmp.ne.s32.totalorder %s60, %s62
      %p66 = scmp.eq.s32.totalorder %s26, 0
      %p67 = por %p65, %p66
      %p68 = scmp.ne.s32.totalorder %s60, %s62
      %p69 = scmp.eq.s32.totalorder %s31, 1
      %p70 = por %p68, %p69
      %p71 = scmp.ne.s32.totalorder %s62, %s63
      %p72 = scmp.eq.s32.totalorder %s31, 0
      %p73 = por %p71, %p72
      %p74 = scmp.ne.s32.totalorder %s62, %s63
      %p75 = scmp.eq.s32.totalorder %s32, 1
      %p76 = por %p74, %p75
      %p78 = scmp.ne.s32.totalorder %s63, %s77
      %p79 = scmp.eq.s32.totalorder %s32, 0
      %p80 = por %p78, %p79
      %s82 = sadd.s32 %s81, 1
      %p85 = scmp.eq.s32.totalorder %s26, 1
      %p86 = scmp.ne.s32.totalorder %s81, %s83
      %p87 = scmp.eq.s32.totalorder %s26, 0
      %p88 = por %p86, %p87
      %p89 = scmp.ne.s32.totalorder %s81, %s83
      %p90 = scmp.eq.s32.totalorder %s31, 1
      %p91 = por %p89, %p90
      %p92 = scmp.ne.s32.totalorder %s83, %s84
      %p93 = scmp.eq.s32.totalorder %s31, 0
      %p94 = por %p92, %p93
      %p95 = scmp.ne.s32.totalorder %s83, %s84
      %p96 = scmp.eq.s32.totalorder %s32, 1
      %p97 = por %p95, %p96
      %p99 = scmp.ne.s32.totalorder %s84, %s98
      %p100 = scmp.eq.s32.totalorder %s32, 0
      %p101 = por %p99, %p100
      %s103 = sadd.s32 %s102, 1
      %p106 = scmp.eq.s32.totalorder %s26, 1
      %p107 = scmp.ne.s32.totalorder %s102, %s104
      %p108 = scmp.eq.s32.totalorder %s26, 0
      %p109 = por %p107, %p108
      %p110 = scmp.ne.s32.totalorder %s102, %s104
      %p111 = scmp.eq.s32.totalorder %s31, 1
      %p112 = por %p110, %p111
      %p113 = scmp.ne.s32.totalorder %s104, %s105
      %p114 = scmp.eq.s32.totalorder %s31, 0
      %p115 = por %p113, %p114
      %p116 = scmp.ne.s32.totalorder %s104, %s105
      %p117 = scmp.eq.s32.totalorder %s32, 1
      %p118 = por %p116, %p117
      %p120 = scmp.ne.s32.totalorder %s105, %s119
      %p121 = scmp.eq.s32.totalorder %s32, 0
      %p122 = por %p120, %p121
      %s124 = sadd.s32 %s123, 1
      %p127 = scmp.eq.s32.totalorder %s26, 1
      %p128 = scmp.ne.s32.totalorder %s123, %s125
      %p129 = scmp.eq.s32.totalorder %s26, 0
      %p130 = por %p128, %p129
      %p131 = scmp.ne.s32.totalorder %s123, %s125
      %p132 = scmp.eq.s32.totalorder %s31, 1
      %p133 = por %p131, %p132
      %p134 = scmp.ne.s32.totalorder %s125, %s126
      %p135 = scmp.eq.s32.totalorder %s31, 0
      %p136 = por %p134, %p135
      %p137 = scmp.ne.s32.totalorder %s125, %s126
      %p138 = scmp.eq.s32.totalorder %s32, 1
      %p139 = por %p137, %p138
      %p141 = scmp.ne.s32.totalorder %s126, %s140
      %p142 = scmp.eq.s32.totalorder %s32, 0
      %p143 = por %p141, %p142
      %s145 = sadd.s32 %s144, 1
      %p148 = scmp.eq.s32.totalorder %s26, 1
      %p149 = scmp.ne.s32.totalorder %s144, %s146
      %p150 = scmp.eq.s32.totalorder %s26, 0
      %p151 = por %p149, %p150
      %p152 = scmp.ne.s32.totalorder %s144, %s146
      %p153 = scmp.eq.s32.totalorder %s31, 1
      %p154 = por %p152, %p153
      %p155 = scmp.ne.s32.totalorder %s146, %s147
      %p156 = scmp.eq.s32.totalorder %s31, 0
      %p157 = por %p155, %p156
      %p158 = scmp.ne.s32.totalorder %s146, %s147
      %p159 = scmp.eq.s32.totalorder %s32, 1
      %p160 = por %p158, %p159
      %p162 = scmp.ne.s32.totalorder %s147, %s161
      %p163 = scmp.eq.s32.totalorder %s32, 0
      %p164 = por %p162, %p163
      %s166 = sadd.s32 %s165, 1
      %p169 = scmp.eq.s32.totalorder %s26, 1
      %p170 = scmp.ne.s32.totalorder %s165, %s167
      %p171 = scmp.eq.s32.totalorder %s26, 0
      %p172 = por %p170, %p171
      %p173 = scmp.ne.s32.totalorder %s165, %s167
      %p174 = scmp.eq.s32.totalorder %s31, 1
      %p175 = por %p173, %p174
      %p176 = scmp.ne.s32.totalorder %s167, %s168
      %p177 = scmp.eq.s32.totalorder %s31, 0
      %p178 = por %p176, %p177
      %p179 = scmp.ne.s32.totalorder %s167, %s168
      %p180 = scmp.eq.s32.totalorder %s32, 1
      %p181 = por %p179, %p180
      %p183 = scmp.ne.s32.totalorder %s168, %s182
      %p184 = scmp.eq.s32.totalorder %s32, 0
      %p185 = por %p183, %p184
      %s187 = sadd.s32 %s186, 1
      %p190 = scmp.eq.s32.totalorder %s26, 1
      %p191 = scmp.ne.s32.totalorder %s186, %s188
      %p192 = scmp.eq.s32.totalorder %s26, 0
      %p193 = por %p191, %p192
      %p194 = scmp.ne.s32.totalorder %s186, %s188
      %p195 = scmp.eq.s32.totalorder %s31, 1
      %p196 = por %p194, %p195
      %p197 = scmp.ne.s32.totalorder %s188, %s189
      %p198 = scmp.eq.s32.totalorder %s31, 0
      %p199 = por %p197, %p198
      %p200 = scmp.ne.s32.totalorder %s188, %s189
      %p201 = scmp.eq.s32.totalorder %s32, 1
      %p202 = por %p200, %p201
      %p204 = scmp.ne.s32.totalorder %s189, %s203
      %p205 = scmp.eq.s32.totalorder %s32, 0
      %p206 = por %p204, %p205
      %s208 = sadd.s32 %s207, 1
      %p211 = scmp.eq.s32.totalorder %s26, 1
      %p212 = scmp.ne.s32.totalorder %s207, %s209
      %p213 = scmp.eq.s32.totalorder %s26, 0
      %p214 = por %p212, %p213
      %p215 = scmp.ne.s32.totalorder %s207, %s209
      %p216 = scmp.eq.s32.totalorder %s31, 1
      %p217 = por %p215, %p216
      %p218 = scmp.ne.s32.totalorder %s209, %s210
      %p219 = scmp.eq.s32.totalorder %s31, 0
      %p220 = por %p218, %p219
      %p221 = scmp.ne.s32.totalorder %s209, %s210
      %p222 = scmp.eq.s32.totalorder %s32, 1
      %p223 = por %p221, %p222
      %p225 = scmp.ne.s32.totalorder %s210, %s224
      %p226 = scmp.eq.s32.totalorder %s32, 0
      %p227 = por %p225, %p226
      %s229 = sadd.s32 %s228, 1
      %p232 = scmp.eq.s32.totalorder %s26, 1
      %p233 = scmp.ne.s32.totalorder %s228, %s230
      %p234 = scmp.eq.s32.totalorder %s26, 0
      %p235 = por %p233, %p234
      %p236 = scmp.ne.s32.totalorder %s228, %s230
      %p237 = scmp.eq.s32.totalorder %s31, 1
      %p238 = por %p236, %p237
      %p239 = scmp.ne.s32.totalorder %s230, %s231
      %p240 = scmp.eq.s32.totalorder %s31, 0
      %p241 = por %p239, %p240
      %p242 = scmp.ne.s32.totalorder %s230, %s231
      %p243 = scmp.eq.s32.totalorder %s32, 1
      %p244 = por %p242, %p243
      %p246 = scmp.ne.s32.totalorder %s231, %s245
      %p247 = scmp.eq.s32.totalorder %s32, 0
      %p248 = por %p246, %p247
      %s250 = sadd.s32 %s249, 1
      %p253 = scmp.eq.s32.totalorder %s26, 1
      %p254 = scmp.ne.s32.totalorder %s249, %s251
      %p255 = scmp.eq.s32.totalorder %s26, 0
      %p256 = por %p254, %p255
      %p257 = scmp.ne.s32.totalorder %s249, %s251
      %p258 = scmp.eq.s32.totalorder %s31, 1
      %p259 = por %p257, %p258
      %p260 = scmp.ne.s32.totalorder %s251, %s252
      %p261 = scmp.eq.s32.totalorder %s31, 0
      %p262 = por %p260, %p261
      %p263 = scmp.ne.s32.totalorder %s251, %s252
      %p264 = scmp.eq.s32.totalorder %s32, 1
      %p265 = por %p263, %p264
      %p267 = scmp.ne.s32.totalorder %s252, %s266
      %p268 = scmp.eq.s32.totalorder %s32, 0
      %p269 = por %p267, %p268
      %s270 = ssub.s32 %s26, %s33
      %p271 = scmp.eq.s32.totalorder %s270, 0
      %s273 = sadd.s32 %s272, 1
      %s274 = scalar_select %p271, %s272, %s273
      %p277 = pneg %p271
      %p278 = scmp.eq.s32.totalorder %s26, 1
      %p279 = por %p277, %p278
      %p280 = scmp.ne.s32.totalorder %s272, %s275
      %p281 = scmp.eq.s32.totalorder %s26, 0
      %p282 = por %p280, %p281
      %p283 = scmp.ne.s32.totalorder %s272, %s275
      %p284 = scmp.eq.s32.totalorder %s31, 1
      %p285 = por %p283, %p284
      %p286 = scmp.ne.s32.totalorder %s275, %s276
      %p287 = scmp.eq.s32.totalorder %s31, 0
      %p288 = por %p286, %p287
      %p289 = scmp.ne.s32.totalorder %s275, %s276
      %p290 = scmp.eq.s32.totalorder %s32, 1
      %p291 = por %p289, %p290
      %p293 = scmp.ne.s32.totalorder %s276, %s292
      %p294 = scmp.eq.s32.totalorder %s32, 0
      %p295 = por %p293, %p294
      %p296 = scmp.le.s32.totalorder 1, %s26
      %p297 = scmp.lt.s32.totalorder %s26, 3
      %p298 = pnand %p296, %p297
      %p299 = pneg %p298
      // Predicated region
      $region9: #{tpu_custom_call.1} parent=5 // pred_check
        _
      $region10: #{tpu_custom_call.1} parent=5 // pred_check_branch
        %301 = sbr.rel (%p298) target = $region12
      $region11: #{tpu_custom_call.1} parent=5 // pred_region
        %s302 = ssub.s32 %s26, 1
        // Predicated region
        $region13: #{tpu_custom_call.1} parent=11 // pred_check
          %p303 = pneg %p73
        $region14: #{tpu_custom_call.1} parent=11 // pred_check_branch
          %305 = sbr.rel (%p303) target = $region16
        $region15: #{tpu_custom_call.1} parent=11 // pred_region
          %s307 = ssub.s32 2048, 2048
          %308 = vsyncadd [#allocation6], %s307
          %s309 = sshll.u32 [#allocation5], 4
          %s310 = int_to_ptr.vmem [resolvable:$true] %s309
          %315 = dma.hbm_to_vmem [thread:$0]  %s1, 2048, %s310, [#allocation6], 128, 128, 8
        $region16: #{tpu_custom_call.1} parent=11 // pred_fallthru
          _
        // Predicated region
        $region17: #{tpu_custom_call.1} parent=11 // pred_check
          %p316 = pneg %p94
        $region18: #{tpu_custom_call.1} parent=11 // pred_check_branch
          %318 = sbr.rel (%p316) target = $region20
        $region19: #{tpu_custom_call.1} parent=11 // pred_region
          _
        $region20: #{tpu_custom_call.1} parent=11 // pred_fallthru
          _
        // Predicated region
        $region21: #{tpu_custom_call.1} parent=11 // pred_check
          %p319 = pneg %p115
        $region22: #{tpu_custom_call.1} parent=11 // pred_check_branch
          %321 = sbr.rel (%p319) target = $region24
        $region23: #{tpu_custom_call.1} parent=11 // pred_region
          %s323 = ssub.s32 2048, 2048
          %324 = vsyncadd [#allocation6], %s323
          %s325 = sshll.u32 [#allocation7], 4
          %s326 = int_to_ptr.vmem [resolvable:$true] %s325
          %331 = dma.hbm_to_vmem [thread:$0]  %s3, 2048, %s326, [#allocation6], 64, 64, 4
        $region24: #{tpu_custom_call.1} parent=11 // pred_fallthru
          _
        // Predicated region
        $region25: #{tpu_custom_call.1} parent=11 // pred_check
          %p332 = pneg %p136
        $region26: #{tpu_custom_call.1} parent=11 // pred_check_branch
          %334 = sbr.rel (%p332) target = $region28
        $region27: #{tpu_custom_call.1} parent=11 // pred_region
          _
        $region28: #{tpu_custom_call.1} parent=11 // pred_fallthru
          _
        // Predicated region
        $region29: #{tpu_custom_call.1} parent=11 // pred_check
          %p335 = pneg %p157
        $region30: #{tpu_custom_call.1} parent=11 // pred_check_branch
          %337 = sbr.rel (%p335) target = $region32
        $region31: #{tpu_custom_call.1} parent=11 // pred_region
          %s339 = ssub.s32 1024, 1024
          %340 = vsyncadd [#allocation9], %s339
          %s341 = sshll.u32 [#allocation8], 4
          %s342 = int_to_ptr.vmem [resolvable:$true] %s341
          %347 = dma.hbm_to_vmem [thread:$0]  %s5, 1024, %s342, [#allocation9], 64, 64, 4
        $region32: #{tpu_custom_call.1} parent=11 // pred_fallthru
          _
        // Predicated region
        $region33: #{tpu_custom_call.1} parent=11 // pred_check
          %p348 = pneg %p178
        $region34: #{tpu_custom_call.1} parent=11 // pred_check_branch
          %350 = sbr.rel (%p348) target = $region36
        $region35: #{tpu_custom_call.1} parent=11 // pred_region
          _
        $region36: #{tpu_custom_call.1} parent=11 // pred_fallthru
          _
        // Predicated region
        $region37: #{tpu_custom_call.1} parent=11 // pred_check
          %p351 = pneg %p199
        $region38: #{tpu_custom_call.1} parent=11 // pred_check_branch
          %353 = sbr.rel (%p351) target = $region40
        $region39: #{tpu_custom_call.1} parent=11 // pred_region
          %s355 = ssub.s32 1024, 1024
          %356 = vsyncadd [#allocation9], %s355
          %s357 = sshll.u32 [#allocation10], 4
          %s358 = int_to_ptr.vmem [resolvable:$true] %s357
          %363 = dma.hbm_to_vmem [thread:$0]  %s7, 1024, %s358, [#allocation9], 64, 64, 4
        $region40: #{tpu_custom_call.1} parent=11 // pred_fallthru
          _
        // Predicated region
        $region41: #{tpu_custom_call.1} parent=11 // pred_check
          %p364 = pneg %p220
        $region42: #{tpu_custom_call.1} parent=11 // pred_check_branch
          %366 = sbr.rel (%p364) target = $region44
        $region43: #{tpu_custom_call.1} parent=11 // pred_region
          _
        $region44: #{tpu_custom_call.1} parent=11 // pred_fallthru
          _
        // Predicated region
        $region45: #{tpu_custom_call.1} parent=11 // pred_check
          %p367 = pneg %p241
        $region46: #{tpu_custom_call.1} parent=11 // pred_check_branch
          %369 = sbr.rel (%p367) target = $region48
        $region47: #{tpu_custom_call.1} parent=11 // pred_region
          %s371 = ssub.s32 2048, 2048
          %372 = vsyncadd [#allocation12], %s371
          %s373 = sshll.u32 [#allocation11], 4
          %s374 = int_to_ptr.vmem [resolvable:$true] %s373
          %379 = dma.hbm_to_vmem [thread:$0]  %s9, 2048, %s374, [#allocation12], 128, 128, 8
        $region48: #{tpu_custom_call.1} parent=11 // pred_fallthru
          _
        // Predicated region
        $region49: #{tpu_custom_call.1} parent=11 // pred_check
          %p380 = pneg %p262
        $region50: #{tpu_custom_call.1} parent=11 // pred_check_branch
          %382 = sbr.rel (%p380) target = $region52
        $region51: #{tpu_custom_call.1} parent=11 // pred_region
          _
        $region52: #{tpu_custom_call.1} parent=11 // pred_fallthru
          _
      $region12: #{tpu_custom_call.1} parent=5 // pred_fallthru
        _
      %p383 = scmp.lt.s32.totalorder %s26, 2
      // Predicated region
      $region53: #{tpu_custom_call.1} parent=5 // pred_check
        %p384 = pneg %p383
      $region54: #{tpu_custom_call.1} parent=5 // pred_check_branch
        %386 = sbr.rel (%p384) target = $region56
      $region55: #{tpu_custom_call.1} parent=5 // pred_region
        // Predicated region
        $region57: #{tpu_custom_call.1} parent=55 // pred_check
          %p387 = pneg %p46
        $region58: #{tpu_custom_call.1} parent=55 // pred_check_branch
          %389 = sbr.rel (%p387) target = $region60
        $region59: #{tpu_custom_call.1} parent=55 // pred_region
          %s390 = sand.u32 %s36, 1
          %s391 = scalar_lea.sflag [#allocation3], %s390
          %s392 = sand.u32 %s36, 1
          %s393 = smul.addr %s392, 64
          %s394 = scalar_lea.vmem [#allocation2], %s393
          %s395 = smul.u32 16, %s26
          %s397 = ssub.s32 1024, 1024
          %398 = vsyncadd %s391, %s397
          %s399 = smul.addr %s395, 64
          %s400 = scalar_lea.hbm %s0, %s399
          %s401 = sshll.u32 %s394, 4
          %s402 = int_to_ptr.vmem [resolvable:$true] %s401
          %407 = dma.hbm_to_vmem [thread:$0]  %s400, 1024, %s402, %s391, 64, 64, 4
        $region60: #{tpu_custom_call.1} parent=55 // pred_fallthru
          _
      $region56: #{tpu_custom_call.1} parent=5 // pred_fallthru
        _
      %p408 = scmp.le.s32.totalorder 1, %s26
      %p409 = scmp.lt.s32.totalorder %s26, 3
      %p410 = pnand %p408, %p409
      %p411 = pneg %p410
      // Predicated region
      $region61: #{tpu_custom_call.1} parent=5 // pred_check
        _
      $region62: #{tpu_custom_call.1} parent=5 // pred_check_branch
        %413 = sbr.rel (%p410) target = $region64
      $region63: #{tpu_custom_call.1} parent=5 // pred_region
        %s414 = ssub.s32 %s26, 1
        %s415 = sand.u32 %s39, 1
        %s416 = scalar_lea.sflag [#allocation3], %s415
        %s417 = sand.u32 %s39, 1
        %s418 = smul.addr %s417, 64
        %s419 = scalar_lea.vmem [#allocation2], %s418
        // Predicated region
        $region65: #{tpu_custom_call.1} parent=63 // pred_check
          %p420 = pneg %p52
        $region66: #{tpu_custom_call.1} parent=63 // pred_check_branch
          %422 = sbr.rel (%p420) target = $region68
        $region67: #{tpu_custom_call.1} parent=63 // pred_region
          %423 = dma.done %s416, 1024
        $region68: #{tpu_custom_call.1} parent=63 // pred_fallthru
          _
        // Predicated region
        $region69: #{tpu_custom_call.1} parent=63 // pred_check
          %p424 = pneg %p73
        $region70: #{tpu_custom_call.1} parent=63 // pred_check_branch
          %426 = sbr.rel (%p424) target = $region72
        $region71: #{tpu_custom_call.1} parent=63 // pred_region
          %427 = dma.done [#allocation6], 2048
        $region72: #{tpu_custom_call.1} parent=63 // pred_fallthru
          _
        // Predicated region
        $region73: #{tpu_custom_call.1} parent=63 // pred_check
          %p428 = pneg %p115
        $region74: #{tpu_custom_call.1} parent=63 // pred_check_branch
          %430 = sbr.rel (%p428) target = $region76
        $region75: #{tpu_custom_call.1} parent=63 // pred_region
          %431 = dma.done [#allocation6], 2048
        $region76: #{tpu_custom_call.1} parent=63 // pred_fallthru
          _
        // Predicated region
        $region77: #{tpu_custom_call.1} parent=63 // pred_check
          %p432 = pneg %p157
        $region78: #{tpu_custom_call.1} parent=63 // pred_check_branch
          %434 = sbr.rel (%p432) target = $region80
        $region79: #{tpu_custom_call.1} parent=63 // pred_region
          %435 = dma.done [#allocation9], 1024
        $region80: #{tpu_custom_call.1} parent=63 // pred_fallthru
          _
        // Predicated region
        $region81: #{tpu_custom_call.1} parent=63 // pred_check
          %p436 = pneg %p199
        $region82: #{tpu_custom_call.1} parent=63 // pred_check_branch
          %438 = sbr.rel (%p436) target = $region84
        $region83: #{tpu_custom_call.1} parent=63 // pred_region
          %439 = dma.done [#allocation9], 1024
        $region84: #{tpu_custom_call.1} parent=63 // pred_fallthru
          _
        // Predicated region
        $region85: #{tpu_custom_call.1} parent=63 // pred_check
          %p440 = pneg %p241
        $region86: #{tpu_custom_call.1} parent=63 // pred_check_branch
          %442 = sbr.rel (%p440) target = $region88
        $region87: #{tpu_custom_call.1} parent=63 // pred_region
          %443 = dma.done [#allocation12], 2048
        $region88: #{tpu_custom_call.1} parent=63 // pred_fallthru
          _
        %s444 = sand.u32 %s39, 1
        %s445 = scalar_lea.sflag [#allocation3], %s444
        %s446 = sand.u32 %s39, 1
        %s447 = smul.addr %s446, 64
        %s448 = scalar_lea.vmem [#allocation2], %s447
        %p449 = pneg %p52
        %p450 = pneg %p49
        %p451 = pneg %p73
        %p452 = pneg %p70
        %p453 = pneg %p94
        %p454 = pneg %p91
        %p455 = pneg %p115
        %p456 = pneg %p112
        %p457 = pneg %p136
        %p458 = pneg %p133
        %p459 = pneg %p157
        %p460 = pneg %p154
        %p461 = pneg %p178
        %p462 = pneg %p175
        %p463 = pneg %p199
        %p464 = pneg %p196
        %p465 = pneg %p220
        %p466 = pneg %p217
        %p467 = pneg %p241
        %p468 = pneg %p238
        %p469 = pneg %p262
        %p470 = pneg %p259
        %p471 = pneg %p288
        %p472 = pneg %p285
        %s473 = sand.u32 %s275, 1
        %s474 = scalar_lea.sflag [#allocation4], %s473
        %s475 = sand.u32 %s275, 1
        %s476 = smul.addr %s475, 256
        %s477 = scalar_lea.vmem [#allocation13], %s476
        %s478 = smul.u32 16, %s31
        %s479 = smul.u32 16, %s31
        %v481 = vld [vmem:[%s419] sm:$0xf]
        %v482 = vld [vmem:[%s419 + $0x4] sm:$0xf]
        %v483 = vld [vmem:[%s419 + $0x8] sm:$0xf]
        %v484 = vld [vmem:[%s419 + $0xc] sm:$0xf]
        %v485 = vld [vmem:[%s419 + $0x10] sm:$0xf]
        %v486 = vld [vmem:[%s419 + $0x14] sm:$0xf]
        %v487 = vld [vmem:[%s419 + $0x18] sm:$0xf]
        %v488 = vld [vmem:[%s419 + $0x1c] sm:$0xf]
        %v489 = vld [vmem:[%s419 + $0x20] sm:$0xf]
        %v490 = vld [vmem:[%s419 + $0x24] sm:$0xf]
        %v491 = vld [vmem:[%s419 + $0x28] sm:$0xf]
        %v492 = vld [vmem:[%s419 + $0x2c] sm:$0xf]
        %v493 = vld [vmem:[%s419 + $0x30] sm:$0xf]
        %v494 = vld [vmem:[%s419 + $0x34] sm:$0xf]
        %v495 = vld [vmem:[%s419 + $0x38] sm:$0xf]
        %v496 = vld [vmem:[%s419 + $0x3c] sm:$0xf]
        %v497 = vld [vmem:[#allocation5] sm:$0xff]
        %v498 = vld [vmem:[#allocation5 + $0x8] sm:$0xff]
        %v499 = vld [vmem:[#allocation5 + $0x10] sm:$0xff]
        %v500 = vld [vmem:[#allocation5 + $0x18] sm:$0xff]
        %v501 = vld [vmem:[#allocation5 + $0x20] sm:$0xff]
        %v502 = vld [vmem:[#allocation5 + $0x28] sm:$0xff]
        %v503 = vld [vmem:[#allocation5 + $0x30] sm:$0xff]
        %v504 = vld [vmem:[#allocation5 + $0x38] sm:$0xff]
        %v505 = vld [vmem:[#allocation5 + $0x40] sm:$0xff]
        %v506 = vld [vmem:[#allocation5 + $0x48] sm:$0xff]
        %v507 = vld [vmem:[#allocation5 + $0x50] sm:$0xff]
        %v508 = vld [vmem:[#allocation5 + $0x58] sm:$0xff]
        %v509 = vld [vmem:[#allocation5 + $0x60] sm:$0xff]
        %v510 = vld [vmem:[#allocation5 + $0x68] sm:$0xff]
        %v511 = vld [vmem:[#allocation5 + $0x70] sm:$0xff]
        %v512 = vld [vmem:[#allocation5 + $0x78] sm:$0xff]
        %v513 = vld [vmem:[%s2] sm:$0x3]
        %v515 = vlaneseq
        %v516 = vshrl.u32 %v515, 7
        %v517 = vsub.s32 0, %v516
        %v518 = vrot.slane %v513, %v517
        %v519 = vlaneseq
        %v520 = vshrl.u32 %v519, 7
        %v521 = vsub.s32 1, %v520
        %v522 = vrot.slane %v513, %v521
        %v541 = vunpack.c.l.b16 %v481
        %v542 = vunpack.c.l.b16 %v482
        %v543 = vunpack.c.l.b16 %v483
        %v544 = vunpack.c.l.b16 %v484
        %v545 = vunpack.c.l.b16 %v485
        %v546 = vunpack.c.l.b16 %v486
        %v547 = vunpack.c.l.b16 %v487
        %v548 = vunpack.c.l.b16 %v488
        %v549 = vunpack.c.l.b16 %v489
        %v550 = vunpack.c.l.b16 %v490
        %v551 = vunpack.c.l.b16 %v491
        %v552 = vunpack.c.l.b16 %v492
        %v553 = vunpack.c.l.b16 %v493
        %v554 = vunpack.c.l.b16 %v494
        %v555 = vunpack.c.l.b16 %v495
        %v556 = vunpack.c.l.b16 %v496
        %v557 = vpack.c.b16 %v542, %v541
        %v558 = vpack.c.b16 %v544, %v543
        %v559 = vpack.c.b16 %v546, %v545
        %v560 = vpack.c.b16 %v548, %v547
        %v561 = vpack.c.b16 %v550, %v549
        %v562 = vpack.c.b16 %v552, %v551
        %v563 = vpack.c.b16 %v554, %v553
        %v564 = vpack.c.b16 %v556, %v555
        %v589 = vunpack.c.l.b16 %v497
        %v590 = vunpack.c.h.b16 %v497
        %v591 = vunpack.c.l.b16 %v498
        %v592 = vunpack.c.h.b16 %v498
        %v593 = vunpack.c.l.b16 %v499
        %v594 = vunpack.c.h.b16 %v499
        %v595 = vunpack.c.l.b16 %v500
        %v596 = vunpack.c.h.b16 %v500
        %v597 = vunpack.c.l.b16 %v501
        %v598 = vunpack.c.h.b16 %v501
        %v599 = vunpack.c.l.b16 %v502
        %v600 = vunpack.c.h.b16 %v502
        %v601 = vunpack.c.l.b16 %v503
        %v602 = vunpack.c.h.b16 %v503
        %v603 = vunpack.c.l.b16 %v504
        %v604 = vunpack.c.h.b16 %v504
        %v605 = vunpack.c.l.b16 %v505
        %v606 = vunpack.c.h.b16 %v505
        %v607 = vunpack.c.l.b16 %v506
        %v608 = vunpack.c.h.b16 %v506
        %v609 = vunpack.c.l.b16 %v507
        %v610 = vunpack.c.h.b16 %v507
        %v611 = vunpack.c.l.b16 %v508
        %v612 = vunpack.c.h.b16 %v508
        %v613 = vunpack.c.l.b16 %v509
        %v614 = vunpack.c.h.b16 %v509
        %v615 = vunpack.c.l.b16 %v510
        %v616 = vunpack.c.h.b16 %v510
        %v617 = vunpack.c.l.b16 %v511
        %v618 = vunpack.c.h.b16 %v511
        %v619 = vunpack.c.l.b16 %v512
        %v620 = vunpack.c.h.b16 %v512
        %v621 = vpack.c.b16 %v591, %v589
        %v622 = vpack.c.b16 %v592, %v590
        %v623 = vpack.c.b16 %v595, %v593
        %v624 = vpack.c.b16 %v596, %v594
        %v625 = vpack.c.b16 %v599, %v597
        %v626 = vpack.c.b16 %v600, %v598
        %v627 = vpack.c.b16 %v603, %v601
        %v628 = vpack.c.b16 %v604, %v602
        %v629 = vpack.c.b16 %v607, %v605
        %v630 = vpack.c.b16 %v608, %v606
        %v631 = vpack.c.b16 %v611, %v609
        %v632 = vpack.c.b16 %v612, %v610
        %v633 = vpack.c.b16 %v615, %v613
        %v634 = vpack.c.b16 %v616, %v614
        %v635 = vpack.c.b16 %v619, %v617
        %v636 = vpack.c.b16 %v620, %v618
        %653 = vmatprep.subr.bf16.mxu0 %v622
        %654 = vmatpush1.bf16.msra.mxu0 %v621
        %655 = vmatprep.subr.bf16.mxu0 %v624
        %656 = vmatpush1.bf16.msra.mxu0 %v623
        %657 = vmatprep.subr.bf16.mxu0 %v626
        %658 = vmatpush1.bf16.msra.mxu0 %v625
        %659 = vmatprep.subr.bf16.mxu0 %v628
        %660 = vmatpush1.bf16.msra.mxu0 %v627
        %661 = vmatprep.subr.bf16.mxu0 %v630
        %662 = vmatpush1.bf16.msra.mxu0 %v629
        %663 = vmatprep.subr.bf16.mxu0 %v632
        %664 = vmatpush1.bf16.msra.mxu0 %v631
        %665 = vmatprep.subr.bf16.mxu0 %v634
        %666 = vmatpush1.bf16.msra.mxu0 %v633
        %667 = vmatprep.subr.bf16.mxu0 %v636
        %668 = vmatpush1.bf16.msra.mxu0 %v635
        %669 = vmatprep.subr.bf16.mxu0 0
        %670 = vmatpush1.bf16.msra.mxu0 0
        %671 = vmatprep.subr.bf16.mxu0 0
        %672 = vmatpush1.bf16.msra.mxu0 0
        %673 = vmatprep.subr.bf16.mxu0 0
        %674 = vmatpush1.bf16.msra.mxu0 0
        %675 = vmatprep.subr.bf16.mxu0 0
        %676 = vmatpush1.bf16.msra.mxu0 0
        %677 = vmatprep.subr.bf16.mxu0 0
        %678 = vmatpush1.bf16.msra.mxu0 0
        %679 = vmatprep.subr.bf16.mxu0 0
        %680 = vmatpush1.bf16.msra.mxu0 0
        %681 = vmatprep.subr.bf16.mxu0 0
        %682 = vmatpush1.bf16.msra.mxu0 0
        %683 = vmatprep.subr.bf16.mxu0 0
        %684 = vmatpush1.bf16.msra.mxu0 0
        %685 = vmatprep.mubr.bf16.mxu0 0
        %686 = vmatmul.mubr.bf16.gmra.mrb[0].mxu0 %v557
        %v687 = vpop.f32.mrb[0].mxu0
        %v688 = vadd.f32 %v518, %v687
        %v689 = vpop.f32.mrb[0].mxu0
        %v690 = vadd.f32 %v522, %v689
        %v691 = vpop.f32.mrb[0].mxu0
        %v692 = vadd.f32 %v518, %v691
        %v693 = vpop.f32.mrb[0].mxu0
        %v694 = vadd.f32 %v522, %v693
        %695 = vmatprep.mubr.bf16.mxu0 0
        %696 = vmatmul.mubr.bf16.gmra.mrb[0].mxu0 %v558
        %v697 = vpop.f32.mrb[0].mxu0
        %v698 = vadd.f32 %v518, %v697
        %v699 = vpop.f32.mrb[0].mxu0
        %v700 = vadd.f32 %v522, %v699
        %v701 = vpop.f32.mrb[0].mxu0
        %v702 = vadd.f32 %v518, %v701
        %v703 = vpop.f32.mrb[0].mxu0
        %v704 = vadd.f32 %v522, %v703
        %705 = vmatprep.mubr.bf16.mxu0 0
        %706 = vmatmul.mubr.bf16.gmra.mrb[0].mxu0 %v559
        %v707 = vpop.f32.mrb[0].mxu0
        %v708 = vadd.f32 %v518, %v707
        %v709 = vpop.f32.mrb[0].mxu0
        %v710 = vadd.f32 %v522, %v709
        %v711 = vpop.f32.mrb[0].mxu0
        %v712 = vadd.f32 %v518, %v711
        %v713 = vpop.f32.mrb[0].mxu0
        %v714 = vadd.f32 %v522, %v713
        %715 = vmatprep.mubr.bf16.mxu0 0
        %716 = vmatmul.mubr.bf16.gmra.mrb[0].mxu0 %v560
        %v717 = vpop.f32.mrb[0].mxu0
        %v718 = vadd.f32 %v518, %v717
        %v719 = vpop.f32.mrb[0].mxu0
        %v720 = vadd.f32 %v522, %v719
        %v721 = vpop.f32.mrb[0].mxu0
        %v722 = vadd.f32 %v518, %v721
        %v723 = vpop.f32.mrb[0].mxu0
        %v724 = vadd.f32 %v522, %v723
        %725 = vmatprep.mubr.bf16.mxu0 0
        %726 = vmatmul.mubr.bf16.gmra.mrb[0].mxu0 %v561
        %v727 = vpop.f32.mrb[0].mxu0
        %v728 = vadd.f32 %v518, %v727
        %v729 = vpop.f32.mrb[0].mxu0
        %v730 = vadd.f32 %v522, %v729
        %v731 = vpop.f32.mrb[0].mxu0
        %v732 = vadd.f32 %v518, %v731
        %v733 = vpop.f32.mrb[0].mxu0
        %v734 = vadd.f32 %v522, %v733
        %735 = vmatprep.mubr.bf16.mxu0 0
        %736 = vmatmul.mubr.bf16.gmra.mrb[0].mxu0 %v562
        %v737 = vpop.f32.mrb[0].mxu0
        %v738 = vadd.f32 %v518, %v737
        %v739 = vpop.f32.mrb[0].mxu0
        %v740 = vadd.f32 %v522, %v739
        %v741 = vpop.f32.mrb[0].mxu0
        %v742 = vadd.f32 %v518, %v741
        %v743 = vpop.f32.mrb[0].mxu0
        %v744 = vadd.f32 %v522, %v743
        %745 = vmatprep.mubr.bf16.mxu0 0
        %746 = vmatmul.mubr.bf16.gmra.mrb[0].mxu0 %v563
        %v747 = vpop.f32.mrb[0].mxu0
        %v748 = vadd.f32 %v518, %v747
        %v749 = vpop.f32.mrb[0].mxu0
        %v750 = vadd.f32 %v522, %v749
        %v751 = vpop.f32.mrb[0].mxu0
        %v752 = vadd.f32 %v518, %v751
        %v753 = vpop.f32.mrb[0].mxu0
        %v754 = vadd.f32 %v522, %v753
        %755 = vmatprep.mubr.bf16.mxu0 0
        %756 = vmatmul.mubr.bf16.gmra.mrb[0].mxu0 %v564
        %v757 = vpop.f32.mrb[0].mxu0
        %v758 = vadd.f32 %v518, %v757
        %v759 = vpop.f32.mrb[0].mxu0
        %v760 = vadd.f32 %v522, %v759
        %v761 = vpop.f32.mrb[0].mxu0
        %v762 = vadd.f32 %v518, %v761
        %v763 = vpop.f32.mrb[0].mxu0
        %v764 = vadd.f32 %v522, %v763
        %765 = vdwg.mxu0
        %v766 = vmax.f32 %v688, 0.0
        %v767 = vmax.f32 %v690, 0.0
        %v768 = vmax.f32 %v692, 0.0
        %v769 = vmax.f32 %v694, 0.0
        %v770 = vmax.f32 %v698, 0.0
        %v771 = vmax.f32 %v700, 0.0
        %v772 = vmax.f32 %v702, 0.0
        %v773 = vmax.f32 %v704, 0.0
        %v774 = vmax.f32 %v708, 0.0
        %v775 = vmax.f32 %v710, 0.0
        %v776 = vmax.f32 %v712, 0.0
        %v777 = vmax.f32 %v714, 0.0
        %v778 = vmax.f32 %v718, 0.0
        %v779 = vmax.f32 %v720, 0.0
        %v780 = vmax.f32 %v722, 0.0
        %v781 = vmax.f32 %v724, 0.0
        %v782 = vmax.f32 %v728, 0.0
        %v783 = vmax.f32 %v730, 0.0
        %v784 = vmax.f32 %v732, 0.0
        %v785 = vmax.f32 %v734, 0.0
        %v786 = vmax.f32 %v738, 0.0
        %v787 = vmax.f32 %v740, 0.0
        %v788 = vmax.f32 %v742, 0.0
        %v789 = vmax.f32 %v744, 0.0
        %v790 = vmax.f32 %v748, 0.0
        %v791 = vmax.f32 %v750, 0.0
        %v792 = vmax.f32 %v752, 0.0
        %v793 = vmax.f32 %v754, 0.0
        %v794 = vmax.f32 %v758, 0.0
        %v795 = vmax.f32 %v760, 0.0
        %v796 = vmax.f32 %v762, 0.0
        %v797 = vmax.f32 %v764, 0.0
        %v798 = vpack.c.bf16 %v768, %v766
        %v799 = vpack.c.bf16 %v769, %v767
        %v800 = vpack.c.bf16 %v772, %v770
        %v801 = vpack.c.bf16 %v773, %v771
        %v802 = vpack.c.bf16 %v776, %v774
        %v803 = vpack.c.bf16 %v777, %v775
        %v804 = vpack.c.bf16 %v780, %v778
        %v805 = vpack.c.bf16 %v781, %v779
        %v806 = vpack.c.bf16 %v784, %v782
        %v807 = vpack.c.bf16 %v785, %v783
        %v808 = vpack.c.bf16 %v788, %v786
        %v809 = vpack.c.bf16 %v789, %v787
        %v810 = vpack.c.bf16 %v792, %v790
        %v811 = vpack.c.bf16 %v793, %v791
        %v812 = vpack.c.bf16 %v796, %v794
        %v813 = vpack.c.bf16 %v797, %v795
        %v814 = vld [vmem:[#allocation7] sm:$0xf]
        %v815 = vld [vmem:[#allocation7 + $0x4] sm:$0xf]
        %v816 = vld [vmem:[#allocation7 + $0x8] sm:$0xf]
        %v817 = vld [vmem:[#allocation7 + $0xc] sm:$0xf]
        %v818 = vld [vmem:[#allocation7 + $0x10] sm:$0xf]
        %v819 = vld [vmem:[#allocation7 + $0x14] sm:$0xf]
        %v820 = vld [vmem:[#allocation7 + $0x18] sm:$0xf]
        %v821 = vld [vmem:[#allocation7 + $0x1c] sm:$0xf]
        %v822 = vld [vmem:[#allocation7 + $0x20] sm:$0xf]
        %v823 = vld [vmem:[#allocation7 + $0x24] sm:$0xf]
        %v824 = vld [vmem:[#allocation7 + $0x28] sm:$0xf]
        %v825 = vld [vmem:[#allocation7 + $0x2c] sm:$0xf]
        %v826 = vld [vmem:[#allocation7 + $0x30] sm:$0xf]
        %v827 = vld [vmem:[#allocation7 + $0x34] sm:$0xf]
        %v828 = vld [vmem:[#allocation7 + $0x38] sm:$0xf]
        %v829 = vld [vmem:[#allocation7 + $0x3c] sm:$0xf]
        %v830 = vld [vmem:[#allocation7 + $0x40] sm:$0xf]
        %v831 = vld [vmem:[#allocation7 + $0x44] sm:$0xf]
        %v832 = vld [vmem:[#allocation7 + $0x48] sm:$0xf]
        %v833 = vld [vmem:[#allocation7 + $0x4c] sm:$0xf]
        %v834 = vld [vmem:[#allocation7 + $0x50] sm:$0xf]
        %v835 = vld [vmem:[#allocation7 + $0x54] sm:$0xf]
        %v836 = vld [vmem:[#allocation7 + $0x58] sm:$0xf]
        %v837 = vld [vmem:[#allocation7 + $0x5c] sm:$0xf]
        %v838 = vld [vmem:[#allocation7 + $0x60] sm:$0xf]
        %v839 = vld [vmem:[#allocation7 + $0x64] sm:$0xf]
        %v840 = vld [vmem:[#allocation7 + $0x68] sm:$0xf]
        %v841 = vld [vmem:[#allocation7 + $0x6c] sm:$0xf]
        %v842 = vld [vmem:[#allocation7 + $0x70] sm:$0xf]
        %v843 = vld [vmem:[#allocation7 + $0x74] sm:$0xf]
        %v844 = vld [vmem:[#allocation7 + $0x78] sm:$0xf]
        %v845 = vld [vmem:[#allocation7 + $0x7c] sm:$0xf]
        %v846 = vld [vmem:[%s4] sm:$0x1]
        %v848 = vlaneseq
        %v849 = vshrl.u32 %v848, 7
        %v850 = vsub.s32 0, %v849
        %v851 = vrot.slane %v846, %v850
        %v885 = vunpack.c.l.b16 %v814
        %v886 = vunpack.c.l.b16 %v815
        %v887 = vunpack.c.l.b16 %v816
        %v888 = vunpack.c.l.b16 %v817
        %v889 = vunpack.c.l.b16 %v818
        %v890 = vunpack.c.l.b16 %v819
        %v891 = vunpack.c.l.b16 %v820
        %v892 = vunpack.c.l.b16 %v821
        %v893 = vunpack.c.l.b16 %v822
        %v894 = vunpack.c.l.b16 %v823
        %v895 = vunpack.c.l.b16 %v824
        %v896 = vunpack.c.l.b16 %v825
        %v897 = vunpack.c.l.b16 %v826
        %v898 = vunpack.c.l.b16 %v827
        %v899 = vunpack.c.l.b16 %v828
        %v900 = vunpack.c.l.b16 %v829
        %v901 = vunpack.c.l.b16 %v830
        %v902 = vunpack.c.l.b16 %v831
        %v903 = vunpack.c.l.b16 %v832
        %v904 = vunpack.c.l.b16 %v833
        %v905 = vunpack.c.l.b16 %v834
        %v906 = vunpack.c.l.b16 %v835
        %v907 = vunpack.c.l.b16 %v836
        %v908 = vunpack.c.l.b16 %v837
        %v909 = vunpack.c.l.b16 %v838
        %v910 = vunpack.c.l.b16 %v839
        %v911 = vunpack.c.l.b16 %v840
        %v912 = vunpack.c.l.b16 %v841
        %v913 = vunpack.c.l.b16 %v842
        %v914 = vunpack.c.l.b16 %v843
        %v915 = vunpack.c.l.b16 %v844
        %v916 = vunpack.c.l.b16 %v845
        %v917 = vpack.c.b16 %v886, %v885
        %v918 = vpack.c.b16 %v888, %v887
        %v919 = vpack.c.b16 %v890, %v889
        %v920 = vpack.c.b16 %v892, %v891
        %v921 = vpack.c.b16 %v894, %v893
        %v922 = vpack.c.b16 %v896, %v895
        %v923 = vpack.c.b16 %v898, %v897
        %v924 = vpack.c.b16 %v900, %v899
        %v925 = vpack.c.b16 %v902, %v901
        %v926 = vpack.c.b16 %v904, %v903
        %v927 = vpack.c.b16 %v906, %v905
        %v928 = vpack.c.b16 %v908, %v907
        %v929 = vpack.c.b16 %v910, %v909
        %v930 = vpack.c.b16 %v912, %v911
        %v931 = vpack.c.b16 %v914, %v913
        %v932 = vpack.c.b16 %v916, %v915
        %949 = vmatprep.subr.bf16.mxu0 0
        %950 = vmatpush1.bf16.msra.mxu0 %v917
        %951 = vmatprep.subr.bf16.mxu0 0
        %952 = vmatpush1.bf16.msra.mxu0 %v918
        %953 = vmatprep.subr.bf16.mxu0 0
        %954 = vmatpush1.bf16.msra.mxu0 %v919
        %955 = vmatprep.subr.bf16.mxu0 0
        %956 = vmatpush1.bf16.msra.mxu0 %v920
        %957 = vmatprep.subr.bf16.mxu0 0
        %958 = vmatpush1.bf16.msra.mxu0 %v921
        %959 = vmatprep.subr.bf16.mxu0 0
        %960 = vmatpush1.bf16.msra.mxu0 %v922
        %961 = vmatprep.subr.bf16.mxu0 0
        %962 = vmatpush1.bf16.msra.mxu0 %v923
        %963 = vmatprep.subr.bf16.mxu0 0
        %964 = vmatpush1.bf16.msra.mxu0 %v924
        %965 = vmatprep.subr.bf16.mxu0 0
        %966 = vmatpush1.bf16.msra.mxu0 %v925
        %967 = vmatprep.subr.bf16.mxu0 0
        %968 = vmatpush1.bf16.msra.mxu0 %v926
        %969 = vmatprep.subr.bf16.mxu0 0
        %970 = vmatpush1.bf16.msra.mxu0 %v927
        %971 = vmatprep.subr.bf16.mxu0 0
        %972 = vmatpush1.bf16.msra.mxu0 %v928
        %973 = vmatprep.subr.bf16.mxu0 0
        %974 = vmatpush1.bf16.msra.mxu0 %v929
        %975 = vmatprep.subr.bf16.mxu0 0
        %976 = vmatpush1.bf16.msra.mxu0 %v930
        %977 = vmatprep.subr.bf16.mxu0 0
        %978 = vmatpush1.bf16.msra.mxu0 %v931
        %979 = vmatprep.subr.bf16.mxu0 0
        %980 = vmatpush1.bf16.msra.mxu0 %v932
        %981 = vmatprep.mubr.bf16.mxu0 %v799
        %982 = vmatmul.mubr.bf16.gmra.mrb[0].mxu0 %v798
        %v983 = vpop.f32.mrb[0].mxu0
        %v984 = vadd.f32 %v851, %v983
        %v985 = vpop.f32.mrb[0].mxu0
        %v986 = vpop.f32.mrb[0].mxu0
        %v987 = vadd.f32 %v851, %v986
        %v988 = vpop.f32.mrb[0].mxu0
        %989 = vmatprep.mubr.bf16.mxu0 %v801
        %990 = vmatmul.mubr.bf16.gmra.mrb[0].mxu0 %v800
        %v991 = vpop.f32.mrb[0].mxu0
        %v992 = vadd.f32 %v851, %v991
        %v993 = vpop.f32.mrb[0].mxu0
        %v994 = vpop.f32.mrb[0].mxu0
        %v995 = vadd.f32 %v851, %v994
        %v996 = vpop.f32.mrb[0].mxu0
        %997 = vmatprep.mubr.bf16.mxu0 %v803
        %998 = vmatmul.mubr.bf16.gmra.mrb[0].mxu0 %v802
        %v999 = vpop.f32.mrb[0].mxu0
        %v1000 = vadd.f32 %v851, %v999
        %v1001 = vpop.f32.mrb[0].mxu0
        %v1002 = vpop.f32.mrb[0].mxu0
        %v1003 = vadd.f32 %v851, %v1002
        %v1004 = vpop.f32.mrb[0].mxu0
        %1005 = vmatprep.mubr.bf16.mxu0 %v805
        %1006 = vmatmul.mubr.bf16.gmra.mrb[0].mxu0 %v804
        %v1007 = vpop.f32.mrb[0].mxu0
        %v1008 = vadd.f32 %v851, %v1007
        %v1009 = vpop.f32.mrb[0].mxu0
        %v1010 = vpop.f32.mrb[0].mxu0
        %v1011 = vadd.f32 %v851, %v1010
        %v1012 = vpop.f32.mrb[0].mxu0
        %1013 = vmatprep.mubr.bf16.mxu0 %v807
        %1014 = vmatmul.mubr.bf16.gmra.mrb[0].mxu0 %v806
        %v1015 = vpop.f32.mrb[0].mxu0
        %v1016 = vadd.f32 %v851, %v1015
        %v1017 = vpop.f32.mrb[0].mxu0
        %v1018 = vpop.f32.mrb[0].mxu0
        %v1019 = vadd.f32 %v851, %v1018
        %v1020 = vpop.f32.mrb[0].mxu0
        %1021 = vmatprep.mubr.bf16.mxu0 %v809
        %1022 = vmatmul.mubr.bf16.gmra.mrb[0].mxu0 %v808
        %v1023 = vpop.f32.mrb[0].mxu0
        %v1024 = vadd.f32 %v851, %v1023
        %v1025 = vpop.f32.mrb[0].mxu0
        %v1026 = vpop.f32.mrb[0].mxu0
        %v1027 = vadd.f32 %v851, %v1026
        %v1028 = vpop.f32.mrb[0].mxu0
        %1029 = vmatprep.mubr.bf16.mxu0 %v811
        %1030 = vmatmul.mubr.bf16.gmra.mrb[0].mxu0 %v810
        %v1031 = vpop.f32.mrb[0].mxu0
        %v1032 = vadd.f32 %v851, %v1031
        %v1033 = vpop.f32.mrb[0].mxu0
        %v1034 = vpop.f32.mrb[0].mxu0
        %v1035 = vadd.f32 %v851, %v1034
        %v1036 = vpop.f32.mrb[0].mxu0
        %1037 = vmatprep.mubr.bf16.mxu0 %v813
        %1038 = vmatmul.mubr.bf16.gmra.mrb[0].mxu0 %v812
        %v1039 = vpop.f32.mrb[0].mxu0
        %v1040 = vadd.f32 %v851, %v1039
        %v1041 = vpop.f32.mrb[0].mxu0
        %v1042 = vpop.f32.mrb[0].mxu0
        %v1043 = vadd.f32 %v851, %v1042
        %v1044 = vpop.f32.mrb[0].mxu0
        %1045 = vdwg.mxu0
        %v1046 = vmax.f32 %v984, 0.0
        %v1047 = vmax.f32 %v987, 0.0
        %v1048 = vmax.f32 %v992, 0.0
        %v1049 = vmax.f32 %v995, 0.0
        %v1050 = vmax.f32 %v1000, 0.0
        %v1051 = vmax.f32 %v1003, 0.0
        %v1052 = vmax.f32 %v1008, 0.0
        %v1053 = vmax.f32 %v1011, 0.0
        %v1054 = vmax.f32 %v1016, 0.0
        %v1055 = vmax.f32 %v1019, 0.0
        %v1056 = vmax.f32 %v1024, 0.0
        %v1057 = vmax.f32 %v1027, 0.0
        %v1058 = vmax.f32 %v1032, 0.0
        %v1059 = vmax.f32 %v1035, 0.0
        %v1060 = vmax.f32 %v1040, 0.0
        %v1061 = vmax.f32 %v1043, 0.0
        %v1062 = vpack.c.bf16 %v1047, %v1046
        %v1063 = vpack.c.bf16 %v1049, %v1048
        %v1064 = vpack.c.bf16 %v1051, %v1050
        %v1065 = vpack.c.bf16 %v1053, %v1052
        %v1066 = vpack.c.bf16 %v1055, %v1054
        %v1067 = vpack.c.bf16 %v1057, %v1056
        %v1068 = vpack.c.bf16 %v1059, %v1058
        %v1069 = vpack.c.bf16 %v1061, %v1060
        %v1070 = vld [vmem:[#allocation8] sm:$0xf]
        %v1071 = vld [vmem:[#allocation8 + $0x4] sm:$0xf]
        %v1072 = vld [vmem:[#allocation8 + $0x8] sm:$0xf]
        %v1073 = vld [vmem:[#allocation8 + $0xc] sm:$0xf]
        %v1074 = vld [vmem:[#allocation8 + $0x10] sm:$0xf]
        %v1075 = vld [vmem:[#allocation8 + $0x14] sm:$0xf]
        %v1076 = vld [vmem:[#allocation8 + $0x18] sm:$0xf]
        %v1077 = vld [vmem:[#allocation8 + $0x1c] sm:$0xf]
        %v1078 = vld [vmem:[#allocation8 + $0x20] sm:$0xf]
        %v1079 = vld [vmem:[#allocation8 + $0x24] sm:$0xf]
        %v1080 = vld [vmem:[#allocation8 + $0x28] sm:$0xf]
        %v1081 = vld [vmem:[#allocation8 + $0x2c] sm:$0xf]
        %v1082 = vld [vmem:[#allocation8 + $0x30] sm:$0xf]
        %v1083 = vld [vmem:[#allocation8 + $0x34] sm:$0xf]
        %v1084 = vld [vmem:[#allocation8 + $0x38] sm:$0xf]
        %v1085 = vld [vmem:[#allocation8 + $0x3c] sm:$0xf]
        %v1086 = vld [vmem:[%s6] sm:$0x1]
        %v1088 = vlaneseq
        %v1089 = vshrl.u32 %v1088, 7
        %v1090 = vsub.s32 0, %v1089
        %v1091 = vrot.slane %v1086, %v1090
        %v1109 = vunpack.c.l.b16 %v1070
        %v1110 = vunpack.c.l.b16 %v1071
        %v1111 = vunpack.c.l.b16 %v1072
        %v1112 = vunpack.c.l.b16 %v1073
        %v1113 = vunpack.c.l.b16 %v1074
        %v1114 = vunpack.c.l.b16 %v1075
        %v1115 = vunpack.c.l.b16 %v1076
        %v1116 = vunpack.c.l.b16 %v1077
        %v1117 = vunpack.c.l.b16 %v1078
        %v1118 = vunpack.c.l.b16 %v1079
        %v1119 = vunpack.c.l.b16 %v1080
        %v1120 = vunpack.c.l.b16 %v1081
        %v1121 = vunpack.c.l.b16 %v1082
        %v1122 = vunpack.c.l.b16 %v1083
        %v1123 = vunpack.c.l.b16 %v1084
        %v1124 = vunpack.c.l.b16 %v1085
        %v1125 = vpack.c.b16 %v1110, %v1109
        %v1126 = vpack.c.b16 %v1112, %v1111
        %v1127 = vpack.c.b16 %v1114, %v1113
        %v1128 = vpack.c.b16 %v1116, %v1115
        %v1129 = vpack.c.b16 %v1118, %v1117
        %v1130 = vpack.c.b16 %v1120, %v1119
        %v1131 = vpack.c.b16 %v1122, %v1121
        %v1132 = vpack.c.b16 %v1124, %v1123
        %1141 = vmatprep.subr.bf16.mxu0 0
        %1142 = vmatpush1.bf16.msra.mxu0 %v1125
        %1143 = vmatprep.subr.bf16.mxu0 0
        %1144 = vmatpush1.bf16.msra.mxu0 %v1126
        %1145 = vmatprep.subr.bf16.mxu0 0
        %1146 = vmatpush1.bf16.msra.mxu0 %v1127
        %1147 = vmatprep.subr.bf16.mxu0 0
        %1148 = vmatpush1.bf16.msra.mxu0 %v1128
        %1149 = vmatprep.subr.bf16.mxu0 0
        %1150 = vmatpush1.bf16.msra.mxu0 %v1129
        %1151 = vmatprep.subr.bf16.mxu0 0
        %1152 = vmatpush1.bf16.msra.mxu0 %v1130
        %1153 = vmatprep.subr.bf16.mxu0 0
        %1154 = vmatpush1.bf16.msra.mxu0 %v1131
        %1155 = vmatprep.subr.bf16.mxu0 0
        %1156 = vmatpush1.bf16.msra.mxu0 %v1132
        %1157 = vmatprep.subr.bf16.mxu0 0
        %1158 = vmatpush1.bf16.msra.mxu0 0
        %1159 = vmatprep.subr.bf16.mxu0 0
        %1160 = vmatpush1.bf16.msra.mxu0 0
        %1161 = vmatprep.subr.bf16.mxu0 0
        %1162 = vmatpush1.bf16.msra.mxu0 0
        %1163 = vmatprep.subr.bf16.mxu0 0
        %1164 = vmatpush1.bf16.msra.mxu0 0
        %1165 = vmatprep.subr.bf16.mxu0 0
        %1166 = vmatpush1.bf16.msra.mxu0 0
        %1167 = vmatprep.subr.bf16.mxu0 0
        %1168 = vmatpush1.bf16.msra.mxu0 0
        %1169 = vmatprep.subr.bf16.mxu0 0
        %1170 = vmatpush1.bf16.msra.mxu0 0
        %1171 = vmatprep.subr.bf16.mxu0 0
        %1172 = vmatpush1.bf16.msra.mxu0 0
        %1173 = vmatprep.mubr.bf16.mxu0 0
        %1174 = vmatmul.mubr.bf16.gmra.mrb[0].mxu0 %v1062
        %v1175 = vpop.f32.mrb[0].mxu0
        %v1176 = vadd.f32 %v1091, %v1175
        %v1177 = vpop.f32.mrb[0].mxu0
        %v1178 = vpop.f32.mrb[0].mxu0
        %v1179 = vadd.f32 %v1091, %v1178
        %v1180 = vpop.f32.mrb[0].mxu0
        %1181 = vmatprep.mubr.bf16.mxu0 0
        %1182 = vmatmul.mubr.bf16.gmra.mrb[0].mxu0 %v1063
        %v1183 = vpop.f32.mrb[0].mxu0
        %v1184 = vadd.f32 %v1091, %v1183
        %v1185 = vpop.f32.mrb[0].mxu0
        %v1186 = vpop.f32.mrb[0].mxu0
        %v1187 = vadd.f32 %v1091, %v1186
        %v1188 = vpop.f32.mrb[0].mxu0
        %1189 = vmatprep.mubr.bf16.mxu0 0
        %1190 = vmatmul.mubr.bf16.gmra.mrb[0].mxu0 %v1064
        %v1191 = vpop.f32.mrb[0].mxu0
        %v1192 = vadd.f32 %v1091, %v1191
        %v1193 = vpop.f32.mrb[0].mxu0
        %v1194 = vpop.f32.mrb[0].mxu0
        %v1195 = vadd.f32 %v1091, %v1194
        %v1196 = vpop.f32.mrb[0].mxu0
        %1197 = vmatprep.mubr.bf16.mxu0 0
        %1198 = vmatmul.mubr.bf16.gmra.mrb[0].mxu0 %v1065
        %v1199 = vpop.f32.mrb[0].mxu0
        %v1200 = vadd.f32 %v1091, %v1199
        %v1201 = vpop.f32.mrb[0].mxu0
        %v1202 = vpop.f32.mrb[0].mxu0
        %v1203 = vadd.f32 %v1091, %v1202
        %v1204 = vpop.f32.mrb[0].mxu0
        %1205 = vmatprep.mubr.bf16.mxu0 0
        %1206 = vmatmul.mubr.bf16.gmra.mrb[0].mxu0 %v1066
        %v1207 = vpop.f32.mrb[0].mxu0
        %v1208 = vadd.f32 %v1091, %v1207
        %v1209 = vpop.f32.mrb[0].mxu0
        %v1210 = vpop.f32.mrb[0].mxu0
        %v1211 = vadd.f32 %v1091, %v1210
        %v1212 = vpop.f32.mrb[0].mxu0
        %1213 = vmatprep.mubr.bf16.mxu0 0
        %1214 = vmatmul.mubr.bf16.gmra.mrb[0].mxu0 %v1067
        %v1215 = vpop.f32.mrb[0].mxu0
        %v1216 = vadd.f32 %v1091, %v1215
        %v1217 = vpop.f32.mrb[0].mxu0
        %v1218 = vpop.f32.mrb[0].mxu0
        %v1219 = vadd.f32 %v1091, %v1218
        %v1220 = vpop.f32.mrb[0].mxu0
        %1221 = vmatprep.mubr.bf16.mxu0 0
        %1222 = vmatmul.mubr.bf16.gmra.mrb[0].mxu0 %v1068
        %v1223 = vpop.f32.mrb[0].mxu0
        %v1224 = vadd.f32 %v1091, %v1223
        %v1225 = vpop.f32.mrb[0].mxu0
        %v1226 = vpop.f32.mrb[0].mxu0
        %v1227 = vadd.f32 %v1091, %v1226
        %v1228 = vpop.f32.mrb[0].mxu0
        %1229 = vmatprep.mubr.bf16.mxu0 0
        %1230 = vmatmul.mubr.bf16.gmra.mrb[0].mxu0 %v1069
        %v1231 = vpop.f32.mrb[0].mxu0
        %v1232 = vadd.f32 %v1091, %v1231
        %v1233 = vpop.f32.mrb[0].mxu0
        %v1234 = vpop.f32.mrb[0].mxu0
        %v1235 = vadd.f32 %v1091, %v1234
        %v1236 = vpop.f32.mrb[0].mxu0
        %1237 = vdwg.mxu0
        %v1238 = vmax.f32 %v1176, 0.0
        %v1239 = vmax.f32 %v1179, 0.0
        %v1240 = vmax.f32 %v1184, 0.0
        %v1241 = vmax.f32 %v1187, 0.0
        %v1242 = vmax.f32 %v1192, 0.0
        %v1243 = vmax.f32 %v1195, 0.0
        %v1244 = vmax.f32 %v1200, 0.0
        %v1245 = vmax.f32 %v1203, 0.0
        %v1246 = vmax.f32 %v1208, 0.0
        %v1247 = vmax.f32 %v1211, 0.0
        %v1248 = vmax.f32 %v1216, 0.0
        %v1249 = vmax.f32 %v1219, 0.0
        %v1250 = vmax.f32 %v1224, 0.0
        %v1251 = vmax.f32 %v1227, 0.0
        %v1252 = vmax.f32 %v1232, 0.0
        %v1253 = vmax.f32 %v1235, 0.0
        %v1254 = vpack.c.bf16 %v1239, %v1238
        %v1255 = vpack.c.bf16 %v1241, %v1240
        %v1256 = vpack.c.bf16 %v1243, %v1242
        %v1257 = vpack.c.bf16 %v1245, %v1244
        %v1258 = vpack.c.bf16 %v1247, %v1246
        %v1259 = vpack.c.bf16 %v1249, %v1248
        %v1260 = vpack.c.bf16 %v1251, %v1250
        %v1261 = vpack.c.bf16 %v1253, %v1252
        %v1262 = vld [vmem:[#allocation10] sm:$0xf]
        %v1263 = vld [vmem:[#allocation10 + $0x4] sm:$0xf]
        %v1264 = vld [vmem:[#allocation10 + $0x8] sm:$0xf]
        %v1265 = vld [vmem:[#allocation10 + $0xc] sm:$0xf]
        %v1266 = vld [vmem:[#allocation10 + $0x10] sm:$0xf]
        %v1267 = vld [vmem:[#allocation10 + $0x14] sm:$0xf]
        %v1268 = vld [vmem:[#allocation10 + $0x18] sm:$0xf]
        %v1269 = vld [vmem:[#allocation10 + $0x1c] sm:$0xf]
        %v1270 = vld [vmem:[#allocation10 + $0x20] sm:$0xf]
        %v1271 = vld [vmem:[#allocation10 + $0x24] sm:$0xf]
        %v1272 = vld [vmem:[#allocation10 + $0x28] sm:$0xf]
        %v1273 = vld [vmem:[#allocation10 + $0x2c] sm:$0xf]
        %v1274 = vld [vmem:[#allocation10 + $0x30] sm:$0xf]
        %v1275 = vld [vmem:[#allocation10 + $0x34] sm:$0xf]
        %v1276 = vld [vmem:[#allocation10 + $0x38] sm:$0xf]
        %v1277 = vld [vmem:[#allocation10 + $0x3c] sm:$0xf]
        %v1278 = vld [vmem:[%s8] sm:$0x1]
        %v1280 = vlaneseq
        %v1281 = vshrl.u32 %v1280, 7
        %v1282 = vsub.s32 0, %v1281
        %v1283 = vrot.slane %v1278, %v1282
        %v1301 = vunpack.c.l.b16 %v1262
        %v1302 = vunpack.c.l.b16 %v1263
        %v1303 = vunpack.c.l.b16 %v1264
        %v1304 = vunpack.c.l.b16 %v1265
        %v1305 = vunpack.c.l.b16 %v1266
        %v1306 = vunpack.c.l.b16 %v1267
        %v1307 = vunpack.c.l.b16 %v1268
        %v1308 = vunpack.c.l.b16 %v1269
        %v1309 = vunpack.c.l.b16 %v1270
        %v1310 = vunpack.c.l.b16 %v1271
        %v1311 = vunpack.c.l.b16 %v1272
        %v1312 = vunpack.c.l.b16 %v1273
        %v1313 = vunpack.c.l.b16 %v1274
        %v1314 = vunpack.c.l.b16 %v1275
        %v1315 = vunpack.c.l.b16 %v1276
        %v1316 = vunpack.c.l.b16 %v1277
        %v1317 = vpack.c.b16 %v1302, %v1301
        %v1318 = vpack.c.b16 %v1304, %v1303
        %v1319 = vpack.c.b16 %v1306, %v1305
        %v1320 = vpack.c.b16 %v1308, %v1307
        %v1321 = vpack.c.b16 %v1310, %v1309
        %v1322 = vpack.c.b16 %v1312, %v1311
        %v1323 = vpack.c.b16 %v1314, %v1313
        %v1324 = vpack.c.b16 %v1316, %v1315
        %1333 = vmatprep.subr.bf16.mxu0 0
        %1334 = vmatpush1.bf16.msra.mxu0 %v1317
        %1335 = vmatprep.subr.bf16.mxu0 0
        %1336 = vmatpush1.bf16.msra.mxu0 %v1318
        %1337 = vmatprep.subr.bf16.mxu0 0
        %1338 = vmatpush1.bf16.msra.mxu0 %v1319
        %1339 = vmatprep.subr.bf16.mxu0 0
        %1340 = vmatpush1.bf16.msra.mxu0 %v1320
        %1341 = vmatprep.subr.bf16.mxu0 0
        %1342 = vmatpush1.bf16.msra.mxu0 %v1321
        %1343 = vmatprep.subr.bf16.mxu0 0
        %1344 = vmatpush1.bf16.msra.mxu0 %v1322
        %1345 = vmatprep.subr.bf16.mxu0 0
        %1346 = vmatpush1.bf16.msra.mxu0 %v1323
        %1347 = vmatprep.subr.bf16.mxu0 0
        %1348 = vmatpush1.bf16.msra.mxu0 %v1324
        %1349 = vmatprep.subr.bf16.mxu0 0
        %1350 = vmatpush1.bf16.msra.mxu0 0
        %1351 = vmatprep.subr.bf16.mxu0 0
        %1352 = vmatpush1.bf16.msra.mxu0 0
        %1353 = vmatprep.subr.bf16.mxu0 0
        %1354 = vmatpush1.bf16.msra.mxu0 0
        %1355 = vmatprep.subr.bf16.mxu0 0
        %1356 = vmatpush1.bf16.msra.mxu0 0
        %1357 = vmatprep.subr.bf16.mxu0 0
        %1358 = vmatpush1.bf16.msra.mxu0 0
        %1359 = vmatprep.subr.bf16.mxu0 0
        %1360 = vmatpush1.bf16.msra.mxu0 0
        %1361 = vmatprep.subr.bf16.mxu0 0
        %1362 = vmatpush1.bf16.msra.mxu0 0
        %1363 = vmatprep.subr.bf16.mxu0 0
        %1364 = vmatpush1.bf16.msra.mxu0 0
        %1365 = vmatprep.mubr.bf16.mxu0 0
        %1366 = vmatmul.mubr.bf16.gmra.mrb[0].mxu0 %v1254
        %v1367 = vpop.f32.mrb[0].mxu0
        %v1368 = vadd.f32 %v1283, %v1367
        %v1369 = vpop.f32.mrb[0].mxu0
        %v1370 = vpop.f32.mrb[0].mxu0
        %v1371 = vadd.f32 %v1283, %v1370
        %v1372 = vpop.f32.mrb[0].mxu0
        %1373 = vmatprep.mubr.bf16.mxu0 0
        %1374 = vmatmul.mubr.bf16.gmra.mrb[0].mxu0 %v1255
        %v1375 = vpop.f32.mrb[0].mxu0
        %v1376 = vadd.f32 %v1283, %v1375
        %v1377 = vpop.f32.mrb[0].mxu0
        %v1378 = vpop.f32.mrb[0].mxu0
        %v1379 = vadd.f32 %v1283, %v1378
        %v1380 = vpop.f32.mrb[0].mxu0
        %1381 = vmatprep.mubr.bf16.mxu0 0
        %1382 = vmatmul.mubr.bf16.gmra.mrb[0].mxu0 %v1256
        %v1383 = vpop.f32.mrb[0].mxu0
        %v1384 = vadd.f32 %v1283, %v1383
        %v1385 = vpop.f32.mrb[0].mxu0
        %v1386 = vpop.f32.mrb[0].mxu0
        %v1387 = vadd.f32 %v1283, %v1386
        %v1388 = vpop.f32.mrb[0].mxu0
        %1389 = vmatprep.mubr.bf16.mxu0 0
        %1390 = vmatmul.mubr.bf16.gmra.mrb[0].mxu0 %v1257
        %v1391 = vpop.f32.mrb[0].mxu0
        %v1392 = vadd.f32 %v1283, %v1391
        %v1393 = vpop.f32.mrb[0].mxu0
        %v1394 = vpop.f32.mrb[0].mxu0
        %v1395 = vadd.f32 %v1283, %v1394
        %v1396 = vpop.f32.mrb[0].mxu0
        %1397 = vmatprep.mubr.bf16.mxu0 0
        %1398 = vmatmul.mubr.bf16.gmra.mrb[0].mxu0 %v1258
        %v1399 = vpop.f32.mrb[0].mxu0
        %v1400 = vadd.f32 %v1283, %v1399
        %v1401 = vpop.f32.mrb[0].mxu0
        %v1402 = vpop.f32.mrb[0].mxu0
        %v1403 = vadd.f32 %v1283, %v1402
        %v1404 = vpop.f32.mrb[0].mxu0
        %1405 = vmatprep.mubr.bf16.mxu0 0
        %1406 = vmatmul.mubr.bf16.gmra.mrb[0].mxu0 %v1259
        %v1407 = vpop.f32.mrb[0].mxu0
        %v1408 = vadd.f32 %v1283, %v1407
        %v1409 = vpop.f32.mrb[0].mxu0
        %v1410 = vpop.f32.mrb[0].mxu0
        %v1411 = vadd.f32 %v1283, %v1410
        %v1412 = vpop.f32.mrb[0].mxu0
        %1413 = vmatprep.mubr.bf16.mxu0 0
        %1414 = vmatmul.mubr.bf16.gmra.mrb[0].mxu0 %v1260
        %v1415 = vpop.f32.mrb[0].mxu0
        %v1416 = vadd.f32 %v1283, %v1415
        %v1417 = vpop.f32.mrb[0].mxu0
        %v1418 = vpop.f32.mrb[0].mxu0
        %v1419 = vadd.f32 %v1283, %v1418
        %v1420 = vpop.f32.mrb[0].mxu0
        %1421 = vmatprep.mubr.bf16.mxu0 0
        %1422 = vmatmul.mubr.bf16.gmra.mrb[0].mxu0 %v1261
        %v1423 = vpop.f32.mrb[0].mxu0
        %v1424 = vadd.f32 %v1283, %v1423
        %v1425 = vpop.f32.mrb[0].mxu0
        %v1426 = vpop.f32.mrb[0].mxu0
        %v1427 = vadd.f32 %v1283, %v1426
        %v1428 = vpop.f32.mrb[0].mxu0
        %1429 = vdwg.mxu0
        %v1430 = vmax.f32 %v1368, 0.0
        %v1431 = vmax.f32 %v1371, 0.0
        %v1432 = vmax.f32 %v1376, 0.0
        %v1433 = vmax.f32 %v1379, 0.0
        %v1434 = vmax.f32 %v1384, 0.0
        %v1435 = vmax.f32 %v1387, 0.0
        %v1436 = vmax.f32 %v1392, 0.0
        %v1437 = vmax.f32 %v1395, 0.0
        %v1438 = vmax.f32 %v1400, 0.0
        %v1439 = vmax.f32 %v1403, 0.0
        %v1440 = vmax.f32 %v1408, 0.0
        %v1441 = vmax.f32 %v1411, 0.0
        %v1442 = vmax.f32 %v1416, 0.0
        %v1443 = vmax.f32 %v1419, 0.0
        %v1444 = vmax.f32 %v1424, 0.0
        %v1445 = vmax.f32 %v1427, 0.0
        %v1446 = vpack.c.bf16 %v1431, %v1430
        %v1447 = vpack.c.bf16 %v1433, %v1432
        %v1448 = vpack.c.bf16 %v1435, %v1434
        %v1449 = vpack.c.bf16 %v1437, %v1436
        %v1450 = vpack.c.bf16 %v1439, %v1438
        %v1451 = vpack.c.bf16 %v1441, %v1440
        %v1452 = vpack.c.bf16 %v1443, %v1442
        %v1453 = vpack.c.bf16 %v1445, %v1444
        %v1454 = vld [vmem:[#allocation11] sm:$0xff]
        %v1455 = vld [vmem:[#allocation11 + $0x8] sm:$0xff]
        %v1456 = vld [vmem:[#allocation11 + $0x10] sm:$0xff]
        %v1457 = vld [vmem:[#allocation11 + $0x18] sm:$0xff]
        %v1458 = vld [vmem:[#allocation11 + $0x20] sm:$0xff]
        %v1459 = vld [vmem:[#allocation11 + $0x28] sm:$0xff]
        %v1460 = vld [vmem:[#allocation11 + $0x30] sm:$0xff]
        %v1461 = vld [vmem:[#allocation11 + $0x38] sm:$0xff]
        %v1462 = vld [vmem:[#allocation11 + $0x40] sm:$0xff]
        %v1463 = vld [vmem:[#allocation11 + $0x48] sm:$0xff]
        %v1464 = vld [vmem:[#allocation11 + $0x50] sm:$0xff]
        %v1465 = vld [vmem:[#allocation11 + $0x58] sm:$0xff]
        %v1466 = vld [vmem:[#allocation11 + $0x60] sm:$0xff]
        %v1467 = vld [vmem:[#allocation11 + $0x68] sm:$0xff]
        %v1468 = vld [vmem:[#allocation11 + $0x70] sm:$0xff]
        %v1469 = vld [vmem:[#allocation11 + $0x78] sm:$0xff]
        %v1470 = vld [vmem:[%s10] sm:$0x3]
        %v1472 = vlaneseq
        %v1473 = vshrl.u32 %v1472, 7
        %v1474 = vsub.s32 0, %v1473
        %v1475 = vrot.slane %v1470, %v1474
        %v1476 = vlaneseq
        %v1477 = vshrl.u32 %v1476, 7
        %v1478 = vsub.s32 1, %v1477
        %v1479 = vrot.slane %v1470, %v1478
        %v1498 = vunpack.c.l.b16 %v1454
        %v1499 = vunpack.c.h.b16 %v1454
        %v1500 = vunpack.c.l.b16 %v1455
        %v1501 = vunpack.c.h.b16 %v1455
        %v1502 = vunpack.c.l.b16 %v1456
        %v1503 = vunpack.c.h.b16 %v1456
        %v1504 = vunpack.c.l.b16 %v1457
        %v1505 = vunpack.c.h.b16 %v1457
        %v1506 = vunpack.c.l.b16 %v1458
        %v1507 = vunpack.c.h.b16 %v1458
        %v1508 = vunpack.c.l.b16 %v1459
        %v1509 = vunpack.c.h.b16 %v1459
        %v1510 = vunpack.c.l.b16 %v1460
        %v1511 = vunpack.c.h.b16 %v1460
        %v1512 = vunpack.c.l.b16 %v1461
        %v1513 = vunpack.c.h.b16 %v1461
        %v1514 = vunpack.c.l.b16 %v1462
        %v1515 = vunpack.c.h.b16 %v1462
        %v1516 = vunpack.c.l.b16 %v1463
        %v1517 = vunpack.c.h.b16 %v1463
        %v1518 = vunpack.c.l.b16 %v1464
        %v1519 = vunpack.c.h.b16 %v1464
        %v1520 = vunpack.c.l.b16 %v1465
        %v1521 = vunpack.c.h.b16 %v1465
        %v1522 = vunpack.c.l.b16 %v1466
        %v1523 = vunpack.c.h.b16 %v1466
        %v1524 = vunpack.c.l.b16 %v1467
        %v1525 = vunpack.c.h.b16 %v1467
        %v1526 = vunpack.c.l.b16 %v1468
        %v1527 = vunpack.c.h.b16 %v1468
        %v1528 = vunpack.c.l.b16 %v1469
        %v1529 = vunpack.c.h.b16 %v1469
        %v1530 = vpack.c.b16 %v1500, %v1498
        %v1531 = vpack.c.b16 %v1501, %v1499
        %v1532 = vpack.c.b16 %v1504, %v1502
        %v1533 = vpack.c.b16 %v1505, %v1503
        %v1534 = vpack.c.b16 %v1508, %v1506
        %v1535 = vpack.c.b16 %v1509, %v1507
        %v1536 = vpack.c.b16 %v1512, %v1510
        %v1537 = vpack.c.b16 %v1513, %v1511
        %v1538 = vpack.c.b16 %v1516, %v1514
        %v1539 = vpack.c.b16 %v1517, %v1515
        %v1540 = vpack.c.b16 %v1520, %v1518
        %v1541 = vpack.c.b16 %v1521, %v1519
        %v1542 = vpack.c.b16 %v1524, %v1522
        %v1543 = vpack.c.b16 %v1525, %v1523
        %v1544 = vpack.c.b16 %v1528, %v1526
        %v1545 = vpack.c.b16 %v1529, %v1527
        %1562 = vmatprep.subr.bf16.mxu0 %v1531
        %1563 = vmatpush1.bf16.msra.mxu0 %v1530
        %1564 = vmatprep.subr.bf16.mxu0 %v1533
        %1565 = vmatpush1.bf16.msra.mxu0 %v1532
        %1566 = vmatprep.subr.bf16.mxu0 %v1535
        %1567 = vmatpush1.bf16.msra.mxu0 %v1534
        %1568 = vmatprep.subr.bf16.mxu0 %v1537
        %1569 = vmatpush1.bf16.msra.mxu0 %v1536
        %1570 = vmatprep.subr.bf16.mxu0 %v1539
        %1571 = vmatpush1.bf16.msra.mxu0 %v1538
        %1572 = vmatprep.subr.bf16.mxu0 %v1541
        %1573 = vmatpush1.bf16.msra.mxu0 %v1540
        %1574 = vmatprep.subr.bf16.mxu0 %v1543
        %1575 = vmatpush1.bf16.msra.mxu0 %v1542
        %1576 = vmatprep.subr.bf16.mxu0 %v1545
        %1577 = vmatpush1.bf16.msra.mxu0 %v1544
        %1578 = vmatprep.subr.bf16.mxu0 0
        %1579 = vmatpush1.bf16.msra.mxu0 0
        %1580 = vmatprep.subr.bf16.mxu0 0
        %1581 = vmatpush1.bf16.msra.mxu0 0
        %1582 = vmatprep.subr.bf16.mxu0 0
        %1583 = vmatpush1.bf16.msra.mxu0 0
        %1584 = vmatprep.subr.bf16.mxu0 0
        %1585 = vmatpush1.bf16.msra.mxu0 0
        %1586 = vmatprep.subr.bf16.mxu0 0
        %1587 = vmatpush1.bf16.msra.mxu0 0
        %1588 = vmatprep.subr.bf16.mxu0 0
        %1589 = vmatpush1.bf16.msra.mxu0 0
        %1590 = vmatprep.subr.bf16.mxu0 0
        %1591 = vmatpush1.bf16.msra.mxu0 0
        %1592 = vmatprep.subr.bf16.mxu0 0
        %1593 = vmatpush1.bf16.msra.mxu0 0
        %1594 = vmatprep.mubr.bf16.mxu0 0
        %1595 = vmatmul.mubr.bf16.gmra.mrb[0].mxu0 %v1446
        %v1596 = vpop.f32.mrb[0].mxu0
        %v1597 = vadd.f32 %v1475, %v1596
        %v1598 = vpop.f32.mrb[0].mxu0
        %v1599 = vadd.f32 %v1479, %v1598
        %v1600 = vpop.f32.mrb[0].mxu0
        %v1601 = vadd.f32 %v1475, %v1600
        %v1602 = vpop.f32.mrb[0].mxu0
        %v1603 = vadd.f32 %v1479, %v1602
        %1604 = vmatprep.mubr.bf16.mxu0 0
        %1605 = vmatmul.mubr.bf16.gmra.mrb[0].mxu0 %v1447
        %v1606 = vpop.f32.mrb[0].mxu0
        %v1607 = vadd.f32 %v1475, %v1606
        %v1608 = vpop.f32.mrb[0].mxu0
        %v1609 = vadd.f32 %v1479, %v1608
        %v1610 = vpop.f32.mrb[0].mxu0
        %v1611 = vadd.f32 %v1475, %v1610
        %v1612 = vpop.f32.mrb[0].mxu0
        %v1613 = vadd.f32 %v1479, %v1612
        %1614 = vmatprep.mubr.bf16.mxu0 0
        %1615 = vmatmul.mubr.bf16.gmra.mrb[0].mxu0 %v1448
        %v1616 = vpop.f32.mrb[0].mxu0
        %v1617 = vadd.f32 %v1475, %v1616
        %v1618 = vpop.f32.mrb[0].mxu0
        %v1619 = vadd.f32 %v1479, %v1618
        %v1620 = vpop.f32.mrb[0].mxu0
        %v1621 = vadd.f32 %v1475, %v1620
        %v1622 = vpop.f32.mrb[0].mxu0
        %v1623 = vadd.f32 %v1479, %v1622
        %1624 = vmatprep.mubr.bf16.mxu0 0
        %1625 = vmatmul.mubr.bf16.gmra.mrb[0].mxu0 %v1449
        %v1626 = vpop.f32.mrb[0].mxu0
        %v1627 = vadd.f32 %v1475, %v1626
        %v1628 = vpop.f32.mrb[0].mxu0
        %v1629 = vadd.f32 %v1479, %v1628
        %v1630 = vpop.f32.mrb[0].mxu0
        %v1631 = vadd.f32 %v1475, %v1630
        %v1632 = vpop.f32.mrb[0].mxu0
        %v1633 = vadd.f32 %v1479, %v1632
        %1634 = vmatprep.mubr.bf16.mxu0 0
        %1635 = vmatmul.mubr.bf16.gmra.mrb[0].mxu0 %v1450
        %v1636 = vpop.f32.mrb[0].mxu0
        %v1637 = vadd.f32 %v1475, %v1636
        %v1638 = vpop.f32.mrb[0].mxu0
        %v1639 = vadd.f32 %v1479, %v1638
        %v1640 = vpop.f32.mrb[0].mxu0
        %v1641 = vadd.f32 %v1475, %v1640
        %v1642 = vpop.f32.mrb[0].mxu0
        %v1643 = vadd.f32 %v1479, %v1642
        %1644 = vmatprep.mubr.bf16.mxu0 0
        %1645 = vmatmul.mubr.bf16.gmra.mrb[0].mxu0 %v1451
        %v1646 = vpop.f32.mrb[0].mxu0
        %v1647 = vadd.f32 %v1475, %v1646
        %v1648 = vpop.f32.mrb[0].mxu0
        %v1649 = vadd.f32 %v1479, %v1648
        %v1650 = vpop.f32.mrb[0].mxu0
        %v1651 = vadd.f32 %v1475, %v1650
        %v1652 = vpop.f32.mrb[0].mxu0
        %v1653 = vadd.f32 %v1479, %v1652
        %1654 = vmatprep.mubr.bf16.mxu0 0
        %1655 = vmatmul.mubr.bf16.gmra.mrb[0].mxu0 %v1452
        %v1656 = vpop.f32.mrb[0].mxu0
        %v1657 = vadd.f32 %v1475, %v1656
        %v1658 = vpop.f32.mrb[0].mxu0
        %v1659 = vadd.f32 %v1479, %v1658
        %v1660 = vpop.f32.mrb[0].mxu0
        %v1661 = vadd.f32 %v1475, %v1660
        %v1662 = vpop.f32.mrb[0].mxu0
        %v1663 = vadd.f32 %v1479, %v1662
        %1664 = vmatprep.mubr.bf16.mxu0 0
        %1665 = vmatmul.mubr.bf16.gmra.mrb[0].mxu0 %v1453
        %v1666 = vpop.f32.mrb[0].mxu0
        %v1667 = vadd.f32 %v1475, %v1666
        %v1668 = vpop.f32.mrb[0].mxu0
        %v1669 = vadd.f32 %v1479, %v1668
        %v1670 = vpop.f32.mrb[0].mxu0
        %v1671 = vadd.f32 %v1475, %v1670
        %v1672 = vpop.f32.mrb[0].mxu0
        %v1673 = vadd.f32 %v1479, %v1672
        %1674 = vdwg.mxu0
        %1675 = vst [vmem:[%s477] sm:$0xff] %v1597
        %1676 = vst [vmem:[%s477 + $0x8] sm:$0xff] %v1599
        %1677 = vst [vmem:[%s477 + $0x10] sm:$0xff] %v1601
        %1678 = vst [vmem:[%s477 + $0x18] sm:$0xff] %v1603
        %1679 = vst [vmem:[%s477 + $0x20] sm:$0xff] %v1607
        %1680 = vst [vmem:[%s477 + $0x28] sm:$0xff] %v1609
        %1681 = vst [vmem:[%s477 + $0x30] sm:$0xff] %v1611
        %1682 = vst [vmem:[%s477 + $0x38] sm:$0xff] %v1613
        %1683 = vst [vmem:[%s477 + $0x40] sm:$0xff] %v1617
        %1684 = vst [vmem:[%s477 + $0x48] sm:$0xff] %v1619
        %1685 = vst [vmem:[%s477 + $0x50] sm:$0xff] %v1621
        %1686 = vst [vmem:[%s477 + $0x58] sm:$0xff] %v1623
        %1687 = vst [vmem:[%s477 + $0x60] sm:$0xff] %v1627
        %1688 = vst [vmem:[%s477 + $0x68] sm:$0xff] %v1629
        %1689 = vst [vmem:[%s477 + $0x70] sm:$0xff] %v1631
        %1690 = vst [vmem:[%s477 + $0x78] sm:$0xff] %v1633
        %1691 = vst [vmem:[%s477 + $0x80] sm:$0xff] %v1637
        %1692 = vst [vmem:[%s477 + $0x88] sm:$0xff] %v1639
        %1693 = vst [vmem:[%s477 + $0x90] sm:$0xff] %v1641
        %1694 = vst [vmem:[%s477 + $0x98] sm:$0xff] %v1643
        %1695 = vst [vmem:[%s477 + $0xa0] sm:$0xff] %v1647
        %1696 = vst [vmem:[%s477 + $0xa8] sm:$0xff] %v1649
        %1697 = vst [vmem:[%s477 + $0xb0] sm:$0xff] %v1651
        %1698 = vst [vmem:[%s477 + $0xb8] sm:$0xff] %v1653
        %1699 = vst [vmem:[%s477 + $0xc0] sm:$0xff] %v1657
        %1700 = vst [vmem:[%s477 + $0xc8] sm:$0xff] %v1659
        %1701 = vst [vmem:[%s477 + $0xd0] sm:$0xff] %v1661
        %1702 = vst [vmem:[%s477 + $0xd8] sm:$0xff] %v1663
        %1703 = vst [vmem:[%s477 + $0xe0] sm:$0xff] %v1667
        %1704 = vst [vmem:[%s477 + $0xe8] sm:$0xff] %v1669
        %1705 = vst [vmem:[%s477 + $0xf0] sm:$0xff] %v1671
        %1706 = vst [vmem:[%s477 + $0xf8] sm:$0xff] %v1673
        %s1707 = sand.u32 %s275, 1
        %s1708 = scalar_lea.sflag [#allocation4], %s1707
        %s1709 = sand.u32 %s275, 1
        %s1710 = smul.addr %s1709, 256
        %s1711 = scalar_lea.vmem [#allocation13], %s1710
        // Predicated region
        $region89: #{tpu_custom_call.1} parent=63 // pred_check
          %p1712 = pneg %p285
        $region90: #{tpu_custom_call.1} parent=63 // pred_check_branch
          %1714 = sbr.rel (%p1712) target = $region92
        $region91: #{tpu_custom_call.1} parent=63 // pred_region
          %s1715 = smul.u32 16, %s31
          %s1717 = ssub.s32 4096, 4096
          %1718 = vsyncadd %s1708, %s1717
          %s1719 = smul.addr %s1715, 2
          %s1720 = smul.addr %s1719, 128
          %s1721 = scalar_lea.hbm %s11, %s1720
          %s1722 = sshll.u32 %s1711, 4
          %s1723 = int_to_ptr.vmem [resolvable:$true] %s1722
          %1728 = dma.vmem_to_hbm [thread:$0]  %s1723, 4096, %s1721, %s1708, 256, 256, 16
        $region92: #{tpu_custom_call.1} parent=63 // pred_fallthru
          _
      $region64: #{tpu_custom_call.1} parent=5 // pred_fallthru
        _
      %p1729 = scmp.le.s32.totalorder 2, %s26
      // Predicated region
      $region93: #{tpu_custom_call.1} parent=5 // pred_check
        %p1730 = pneg %p1729
      $region94: #{tpu_custom_call.1} parent=5 // pred_check_branch
        %1732 = sbr.rel (%p1730) target = $region96
      $region95: #{tpu_custom_call.1} parent=5 // pred_region
        %s1733 = ssub.s32 %s26, 2
        // Predicated region
        $region97: #{tpu_custom_call.1} parent=95 // pred_check
          %p1734 = pneg %p291
        $region98: #{tpu_custom_call.1} parent=95 // pred_check_branch
          %1736 = sbr.rel (%p1734) target = $region100
        $region99: #{tpu_custom_call.1} parent=95 // pred_region
          %s1737 = sand.u32 %s276, 1
          %s1738 = scalar_lea.sflag [#allocation4], %s1737
          %s1739 = sand.u32 %s276, 1
          %s1740 = smul.addr %s1739, 256
          %s1741 = scalar_lea.vmem [#allocation13], %s1740
          %1742 = dma.done %s1738, 4096
        $region100: #{tpu_custom_call.1} parent=95 // pred_fallthru
          _
      $region96: #{tpu_custom_call.1} parent=5 // pred_fallthru
        _
    $region6: #{tpu_custom_call.1} parent=1 // loop_footer
      %s30 = sadd.s32 1, %s26
    $region7: #{tpu_custom_call.1} parent=1 // loop_footer_branch
      %25 = sbr.rel target = $region3
    $region8: #{tpu_custom_call.1} parent=1 // loop_exit
      _
    %1743 = vsyncpa [#allocation3], 1
    %s1744 = scalar_lea.sflag [#allocation3], 1
    %1745 = vsyncpa %s1744, 1
    %1746 = vsyncpa [#allocation6], 1
    %1747 = vsyncpa [#allocation9], 1
    %1748 = vsyncpa [#allocation12], 1
    %1749 = vsyncpa [#allocation4], 1
    %s1750 = scalar_lea.sflag [#allocation4], 1
    %1751 = vsyncpa %s1750, 1

</llo_original>
